<compile_context>
chip_gen: v6e
topology: v6e:2x2x1
jax: 0.10.0
libtpu: 0.0.40
codegen_flags: <defaults>
</compile_context>

<pallas_src>
import jax
import jax.numpy as jnp
from jax import lax
from jax.experimental import pallas as pl
from jax.experimental.pallas import tpu as pltpu

LANE = 128


def _round_up(x, m):
    return ((x + m - 1) // m) * m


def _pick_batch_tile(batch, seq_len, target_rows=256, max_rows=2048):
    """Smallest divisor of `batch` whose flattened row count reaches target_rows
    (falls back to the largest divisor that stays under max_rows)."""
    best = 1
    for d in range(1, batch + 1):
        if batch % d != 0:
            continue
        if d * seq_len > max_rows and d > 1:
            break
        best = d
        if d * seq_len >= target_rows:
            break
    return best


def _const_index_map(ndim):
    if ndim == 2:
        return lambda b: (0, 0)
    return lambda b: (0, 0, 0)


# ----------------------------------------------------------------------------
# Fused Pallas kernel: full TCN forward for one batch tile per grid step.
# ----------------------------------------------------------------------------
def _make_fused_kernel(kernel_size, b_tile, seq_len, out_size, block_cfgs):
    """block_cfgs: list of dicts {'dilation': int, 'has_down': bool}."""
    K, L, Bt = kernel_size, seq_len, b_tile
    M = Bt * L

    def kernel(*refs):
        x_ref, n_ref, o_ref = refs[0], refs[1], refs[-1]
        it = iter(refs[2:-1])

        cin = x_ref.shape[-1]
        h = x_ref[...].reshape(M, cin).astype(jnp.float32)   # (M, Cin) rows = batch*time
        n_idx = n_ref[...]                                    # (M, 1) time index within seq

        mask_cache = {}

        def row_mask(s):
            # rows whose shifted time index stays inside [0, L)
            if s not in mask_cache:
                mask_cache[s] = (n_idx + s >= 0) & (n_idx + s < L)
            return mask_cache[s]

        def shifted(a, s):
            # out[m, :] = a[m + s, :] if the shift stays within the same length-L
            # sequence, else 0.  The roll is over the flattened (batch*time) axis;
            # rows that would leak across a batch boundary are exactly the rows
            # the mask zeroes.
            if s == 0:
                return a.astype(jnp.bfloat16)
            if abs(s) >= L:
                return jnp.zeros(a.shape, jnp.bfloat16)
            rolled = pltpu.roll(a, (-s) % M, axis=0)          # rolled[m] = a[(m+s) % M]
            return jnp.where(row_mask(s), rolled, 0.0).astype(jnp.bfloat16)

        def conv(a, w_ref, b_ref, shifts):
            if len(w_ref.shape) == 3:
                # Narrow (non-lane-full) input channels: per-tap matmuls.
                acc = None
                for t, s in enumerate(shifts):
                    term = jnp.dot(shifted(a, s), w_ref[t],
                                   preferred_element_type=jnp.float32)
                    acc = term if acc is None else acc + term
                return acc + b_ref[...]
            # Lane-full input: stack taps along lanes -> single K*Cp-deep matmul.
            parts = [shifted(a, s) for s in shifts]
            stacked = parts[0] if len(parts) == 1 else jnp.concatenate(parts, axis=1)
            return (jnp.dot(stacked, w_ref[...],
                            preferred_element_type=jnp.float32) + b_ref[...])

        for cfg in block_cfgs:
            d = cfg["dilation"]
            p = (K - 1) * d
            base = -p if (p % 2 != 0) else -(p // 2)   # Chomp1d: end-chomp / centre-crop
            shifts = [base + t * d for t in range(K)]

            w1 = next(it); b1 = next(it); w2 = next(it); b2 = next(it)
            if cfg["has_down"]:
                wd = next(it); bd = next(it)
                res = (jnp.dot(h.astype(jnp.bfloat16), wd[...],
                               preferred_element_type=jnp.float32) + bd[...])
            else:
                res = h

            # conv1 -> chomp1 -> relu1   (dropout1 is identity at inference)
            a = jnp.maximum(conv(h, w1, b1, shifts), 0.0)
            # TODO(synk): training-mode nn.Dropout(p=0.2) not modeled (inference forward).
            # conv2 -> chomp2 -> relu2
            a = jnp.maximum(conv(a, w2, b2, shifts), 0.0)
            # residual add + final ReLU (all f32)
            h = jnp.maximum(a + res, 0.0)

        lw = next(it); lb = next(it)
        out = (jnp.dot(h.astype(jnp.bfloat16), lw[...],
                       preferred_element_type=jnp.float32) + lb[...])
        o_ref[...] = out[:, :out_size].reshape(Bt, L, out_size).astype(o_ref.dtype)

    return kernel


# ----------------------------------------------------------------------------
# Wrapper: lane-pad parameters (bf16 matmul operands), one pallas_call.
# ----------------------------------------------------------------------------
def _prepare_params(params, input_size, cp, kernel_size):
    """bf16 matmul weights (taps stacked along the contraction when the input is
    lane-full), f32 biases, everything zero-padded to cp output lanes."""
    K = kernel_size
    flat, cfgs = [], []
    in_w = input_size                       # activation lane width entering the block
    for i, blk in enumerate(params["blocks"]):
        _, c_in, c_out = blk["w1"].shape
        w1 = jnp.zeros((K, in_w, cp), jnp.float32).at[:, :c_in, :c_out].set(blk["w1"])
        if in_w % LANE == 0:
            w1 = w1.reshape(K * in_w, cp)   # stacked-tap layout: row t*in_w + cin
        b1 = jnp.zeros((1, cp), jnp.float32).at[0, :c_out].set(blk["b1"])

        _, c_in2, c_out2 = blk["w2"].shape
        w2 = (jnp.zeros((K, cp, cp), jnp.float32)
              .at[:, :c_in2, :c_out2].set(blk["w2"]).reshape(K * cp, cp))
        b2 = jnp.zeros((1, cp), jnp.float32).at[0, :c_out2].set(blk["b2"])
        flat += [w1.astype(jnp.bfloat16), b1, w2.astype(jnp.bfloat16), b2]

        has_down = blk["wd"] is not None
        # Block 0 with a narrow input still needs a (possibly identity) 1x1 matmul
        # so the residual comes out lane-padded to cp.
        need_down = has_down or (i == 0 and in_w != cp)
        if need_down:
            wd = jnp.zeros((in_w, cp), jnp.float32)
            bd = jnp.zeros((1, cp), jnp.float32)
            if has_down:
                wd = wd.at[:c_in, :c_out].set(blk["wd"][0])
                bd = bd.at[0, :c_out].set(blk["bd"])
            else:
                wd = wd.at[:c_in, :c_in].set(jnp.eye(c_in, dtype=jnp.float32))
            flat += [wd.astype(jnp.bfloat16), bd]
        cfgs.append({"dilation": 2 ** i, "has_down": need_down})
        in_w = cp

    c_last, c_out = params["lin_w"].shape
    lw = jnp.zeros((cp, cp), jnp.float32).at[:c_last, :c_out].set(params["lin_w"])
    lb = jnp.zeros((1, cp), jnp.float32).at[0, :c_out].set(params["lin_b"])
    flat += [lw.astype(jnp.bfloat16), lb]
    return flat, cfgs


def tcn_forward(x, params, kernel_size, output_size, channel_last=True):
    xh = x if channel_last else jnp.transpose(x, (0, 2, 1))
    B, L, Cin = xh.shape

    widths = [Cin, output_size]
    for blk in params["blocks"]:
        widths += [blk["w1"].shape[2], blk["w2"].shape[2]]
    cp = _round_up(max(widths), LANE)

    flat, cfgs = _prepare_params(params, Cin, cp, kernel_size)

    b_tile = _pick_batch_tile(B, L)
    n_steps = B // b_tile
    M = b_tile * L

    # time index of every flattened row (tiny int32 table; avoids in-kernel mod)
    n_pos = jnp.tile(jnp.arange(L, dtype=jnp.int32), b_tile).reshape(M, 1)

    kernel = _make_fused_kernel(kernel_size, b_tile, L, output_size, cfgs)

    in_specs = [
        pl.BlockSpec((b_tile, L, Cin), lambda b: (b, 0, 0)),
        pl.BlockSpec((M, 1), _const_index_map(2)),
    ]
    for a in flat:
        in_specs.append(pl.BlockSpec(a.shape, _const_index_map(a.ndim)))

    out = pl.pallas_call(
        kernel,
        out_shape=jax.ShapeDtypeStruct((B, L, output_size), xh.dtype),
        grid=(n_steps,),
        in_specs=in_specs,
        out_specs=pl.BlockSpec((b_tile, L, output_size), lambda b: (b, 0, 0)),
        compiler_params=pltpu.CompilerParams(
            dimension_semantics=("parallel",)),
    )(xh, n_pos, *flat)
    return out


# ----------------------------------------------------------------------------
# Deterministic parameter init (weight_norm folded into effective weights)
# ----------------------------------------------------------------------------
def _weight_norm_conv(key, cin, cout, k):
    kv, kg, kb = jax.random.split(key, 3)
    v = 0.05 * jax.random.normal(kv, (cout, cin, k), jnp.float32)       # torch (Cout, Cin, K)
    g = 0.5 + 0.5 * jax.random.uniform(kg, (cout,), jnp.float32)
    norm = jnp.sqrt(jnp.sum(v * v, axis=(1, 2), keepdims=True)) + 1e-12
    w_eff = g[:, None, None] * v / norm
    w_taps = jnp.transpose(w_eff, (2, 1, 0))                            # (K, Cin, Cout)
    b = 0.1 * jax.random.normal(kb, (cout,), jnp.float32)
    return w_taps, b


def _plain_conv(key, cin, cout, k):
    kw, kb = jax.random.split(key, 2)
    w = 0.01 * jax.random.normal(kw, (cout, cin, k), jnp.float32)
    w_taps = jnp.transpose(w, (2, 1, 0))
    b = 0.1 * jax.random.normal(kb, (cout,), jnp.float32)
    return w_taps, b


def init_tcn_params(key, input_size, output_size, num_channels, kernel_size):
    blocks = []
    in_c = input_size
    keys = jax.random.split(key, len(num_channels) + 1)
    for i, out_c in enumerate(num_channels):
        k1, k2, kd = jax.random.split(keys[i], 3)
        w1, b1 = _weight_norm_conv(k1, in_c, out_c, kernel_size)
        w2, b2 = _weight_norm_conv(k2, out_c, out_c, kernel_size)
        if in_c != out_c:
            wd, bd = _plain_conv(kd, in_c, out_c, 1)
        else:
            wd, bd = None, None
        blocks.append({"w1": w1, "b1": b1, "w2": w2, "b2": b2, "wd": wd, "bd": bd})
        in_c = out_c
    kw, kb = jax.random.split(keys[-1], 2)
    lin_w = 0.01 * jax.random.normal(kw, (num_channels[-1], output_size), jnp.float32)
    lin_b = 0.1 * jax.random.normal(kb, (output_size,), jnp.float32)
    return {"blocks": blocks, "lin_w": lin_w, "lin_b": lin_b}


# ----------------------------------------------------------------------------
# Pure-JAX reference (conv/chomp/residual semantics); mm_dtype lets us build a
# matched-precision (bf16-operand, f32-accumulate) reference mirroring the kernel.
# ----------------------------------------------------------------------------
def _ref_conv1d(x, w_taps, b, dilation, padding, mm_dtype):
    y = lax.conv_general_dilated(
        x.astype(mm_dtype), w_taps.astype(mm_dtype),
        window_strides=(1,), padding=[(padding, padding)],
        rhs_dilation=(dilation,), dimension_numbers=("NHC", "HIO", "NHC"),
        preferred_element_type=jnp.float32)
    return y + b[None, None, :]


def _ref_chomp(y, p):
    if p == 0:
        return y
    if p % 2 != 0:
        return y[:, :-p, :]
    return y[:, p // 2:-(p // 2), :]


def _ref_block(x, blk, dilation, k, mm_dtype):
    p = (k - 1) * dilation
    h = jax.nn.relu(_ref_chomp(_ref_conv1d(x, blk["w1"], blk["b1"], dilation, p, mm_dtype), p))
    h2 = jax.nn.relu(_ref_chomp(_ref_conv1d(h, blk["w2"], blk["b2"], dilation, p, mm_dtype), p))
    res = x if blk["wd"] is None else _ref_conv1d(x, blk["wd"], blk["bd"], 1, 0, mm_dtype)
    return jax.nn.relu(h2 + res)


def _ref_forward(x, params, k, mm_dtype=jnp.float32):
    h = x
    for i, blk in enumerate(params["blocks"]):
        h = _ref_block(h, blk, 2 ** i, k, mm_dtype)
    head = jnp.einsum("blc,co->blo", h.astype(mm_dtype),
                      params["lin_w"].astype(mm_dtype),
                      preferred_element_type=jnp.float32)
    return head + params["lin_b"][None, None, :]


# ----------------------------------------------------------------------------
if __name__ == "__main__":
    # TCN(input_size=4, output_size=3, num_channels=[8, 16], kernel_size=2, dropout=0.2)
    B, L = 2, 16
    input_size, output_size = 4, 3
    num_channels = [8, 16]
    kernel_size = 2

    key = jax.random.PRNGKey(0)
    kx, kp = jax.random.split(key)
    x = jax.random.normal(kx, (B, L, input_size), jnp.float32)  # channel_last=True input
    params = init_tcn_params(kp, input_size, output_size, num_channels, kernel_size)

    out = tcn_forward(x, params, kernel_size, output_size, channel_last=True)
    out = jax.block_until_ready(out)
    assert out.shape == (B, L, output_size), out.shape

    # Matched-precision reference (bf16 matmul operands, f32 accumulation): tight check.
    ref_bf16 = jax.block_until_ready(_ref_forward(x, params, kernel_size, jnp.bfloat16))
    err_bf16 = float(jnp.max(jnp.abs(out - ref_bf16)))
    assert jnp.allclose(out, ref_bf16, atol=2e-3, rtol=2e-3), err_bf16

    # Full-f32 reference: loose sanity check (only bf16 operand rounding differs).
    ref_f32 = jax.block_until_ready(_ref_forward(x, params, kernel_size, jnp.float32))
    err_f32 = float(jnp.max(jnp.abs(out - ref_f32)))
    assert jnp.allclose(out, ref_f32, atol=5e-2, rtol=5e-2), err_f32

    print("KERNEL_OK")
</pallas_src>

<mosaic_0001>
module attributes {stable_mosaic.version = 11 : i64} {
  func.func @kernel(%arg0: i32, %arg1: memref<2x16x4xf32, #tpu.memory_space<vmem>>, %arg2: memref<32x1xi32, #tpu.memory_space<vmem>>, %arg3: memref<2x4x128xbf16, #tpu.memory_space<vmem>>, %arg4: memref<1x128xf32, #tpu.memory_space<vmem>>, %arg5: memref<256x128xbf16, #tpu.memory_space<vmem>>, %arg6: memref<1x128xf32, #tpu.memory_space<vmem>>, %arg7: memref<4x128xbf16, #tpu.memory_space<vmem>>, %arg8: memref<1x128xf32, #tpu.memory_space<vmem>>, %arg9: memref<256x128xbf16, #tpu.memory_space<vmem>>, %arg10: memref<1x128xf32, #tpu.memory_space<vmem>>, %arg11: memref<256x128xbf16, #tpu.memory_space<vmem>>, %arg12: memref<1x128xf32, #tpu.memory_space<vmem>>, %arg13: memref<128x128xbf16, #tpu.memory_space<vmem>>, %arg14: memref<1x128xf32, #tpu.memory_space<vmem>>, %arg15: memref<128x128xbf16, #tpu.memory_space<vmem>>, %arg16: memref<1x128xf32, #tpu.memory_space<vmem>>, %arg17: memref<2x16x3xf32, #tpu.memory_space<vmem>>) attributes {dimension_semantics = [#tpu.dimension_semantics<parallel>], iteration_bounds = array<i64: 1>, scalar_prefetch = 0 : i64, scratch_operands = 0 : i64, tpu.core_type = #tpu.core_type<tc>, window_params = [{transform_indices = @transform_0, window_bounds = array<i64: 2, 16, 4>}, {pipeline_mode = #tpu.pipeline_mode<synchronous>, transform_indices = @transform_1, window_bounds = array<i64: 32, 1>}, {pipeline_mode = #tpu.pipeline_mode<synchronous>, transform_indices = @transform_2, window_bounds = array<i64: 2, 4, 128>}, {pipeline_mode = #tpu.pipeline_mode<synchronous>, transform_indices = @transform_3, window_bounds = array<i64: 1, 128>}, {pipeline_mode = #tpu.pipeline_mode<synchronous>, transform_indices = @transform_4, window_bounds = array<i64: 256, 128>}, {pipeline_mode = #tpu.pipeline_mode<synchronous>, transform_indices = @transform_5, window_bounds = array<i64: 1, 128>}, {pipeline_mode = #tpu.pipeline_mode<synchronous>, transform_indices = @transform_6, window_bounds = array<i64: 4, 128>}, {pipeline_mode = #tpu.pipeline_mode<synchronous>, transform_indices = @transform_7, window_bounds = array<i64: 1, 128>}, {pipeline_mode = #tpu.pipeline_mode<synchronous>, transform_indices = @transform_8, window_bounds = array<i64: 256, 128>}, {pipeline_mode = #tpu.pipeline_mode<synchronous>, transform_indices = @transform_9, window_bounds = array<i64: 1, 128>}, {pipeline_mode = #tpu.pipeline_mode<synchronous>, transform_indices = @transform_10, window_bounds = array<i64: 256, 128>}, {pipeline_mode = #tpu.pipeline_mode<synchronous>, transform_indices = @transform_11, window_bounds = array<i64: 1, 128>}, {pipeline_mode = #tpu.pipeline_mode<synchronous>, transform_indices = @transform_12, window_bounds = array<i64: 128, 128>}, {pipeline_mode = #tpu.pipeline_mode<synchronous>, transform_indices = @transform_13, window_bounds = array<i64: 1, 128>}, {pipeline_mode = #tpu.pipeline_mode<synchronous>, transform_indices = @transform_14, window_bounds = array<i64: 128, 128>}, {pipeline_mode = #tpu.pipeline_mode<synchronous>, transform_indices = @transform_15, window_bounds = array<i64: 1, 128>}, {transform_indices = @transform_16, window_bounds = array<i64: 2, 16, 3>}]} {
    %c0 = arith.constant 0 : index
    %c0_0 = arith.constant 0 : index
    %c0_1 = arith.constant 0 : index
    %0 = vector.load %arg1[%c0, %c0_0, %c0_1] : memref<2x16x4xf32, #tpu.memory_space<vmem>>, vector<2x16x4xf32>
    %1 = vector.shape_cast %0 : vector<2x16x4xf32> to vector<32x4xf32>
    %c0_2 = arith.constant 0 : index
    %c0_3 = arith.constant 0 : index
    %2 = vector.load %arg2[%c0_2, %c0_3] : memref<32x1xi32, #tpu.memory_space<vmem>>, vector<32x1xi32>
    %3 = arith.truncf %1 : vector<32x4xf32> to vector<32x4xbf16>
    %c0_4 = arith.constant 0 : index
    %c0_5 = arith.constant 0 : index
    %4 = vector.load %arg7[%c0_4, %c0_5] : memref<4x128xbf16, #tpu.memory_space<vmem>>, vector<4x128xbf16>
    %cst = arith.constant dense<0.000000e+00> : vector<32x128xf32>
    %5 = tpu.matmul %3, %4, %cst {dimension_numbers = #tpu.dot_dimension_numbers<[1], [0], [0], [1], [0, 0, 1, 1], [], []>} : vector<32x4xbf16>, vector<4x128xbf16>, vector<32x128xf32> -> vector<32x128xf32>
    %c0_6 = arith.constant 0 : index
    %c0_7 = arith.constant 0 : index
    %6 = vector.load %arg8[%c0_6, %c0_7] : memref<1x128xf32, #tpu.memory_space<vmem>>, vector<1x128xf32>
    %7 = vector.broadcast %6 : vector<1x128xf32> to vector<32x128xf32>
    %8 = arith.addf %5, %7 : vector<32x128xf32>
    %c1_i32 = arith.constant 1 : i32
    %9 = tpu.dynamic_rotate %1 by %c1_i32 dim 0 : vector<32x4xf32>, i32 -> vector<32x4xf32>
    %c-1_i32 = arith.constant -1 : i32
    %10 = vector.broadcast %c-1_i32 : i32 to vector<32x1xi32>
    %11 = arith.addi %2, %10 : vector<32x1xi32>
    %c0_i32 = arith.constant 0 : i32
    %12 = vector.broadcast %c0_i32 : i32 to vector<32x1xi32>
    %13 = arith.cmpi sge, %11, %12 : vector<32x1xi32>
    %c-1_i32_8 = arith.constant -1 : i32
    %14 = vector.broadcast %c-1_i32_8 : i32 to vector<32x1xi32>
    %15 = arith.addi %2, %14 : vector<32x1xi32>
    %c16_i32 = arith.constant 16 : i32
    %16 = vector.broadcast %c16_i32 : i32 to vector<32x1xi32>
    %17 = arith.cmpi slt, %15, %16 : vector<32x1xi32>
    %18 = arith.andi %13, %17 : vector<32x1xi1>
    %cst_9 = arith.constant 0.000000e+00 : f32
    %19 = vector.shape_cast %18 : vector<32x1xi1> to vector<32x1xi1>
    %20 = vector.broadcast %19 : vector<32x1xi1> to vector<32x4xi1>
    %21 = vector.broadcast %cst_9 : f32 to vector<32x4xf32>
    %22 = arith.select %20, %9, %21 : vector<32x4xi1>, vector<32x4xf32>
    %23 = arith.truncf %22 : vector<32x4xf32> to vector<32x4xbf16>
    %c0_10 = arith.constant 0 : index
    %c0_11 = arith.constant 0 : index
    %c0_12 = arith.constant 0 : index
    %24 = vector.load %arg3[%c0_10, %c0_11, %c0_12] : memref<2x4x128xbf16, #tpu.memory_space<vmem>>, vector<1x4x128xbf16>
    %25 = vector.shape_cast %24 : vector<1x4x128xbf16> to vector<4x128xbf16>
    %cst_13 = arith.constant dense<0.000000e+00> : vector<32x128xf32>
    %26 = tpu.matmul %23, %25, %cst_13 {dimension_numbers = #tpu.dot_dimension_numbers<[1], [0], [0], [1], [0, 0, 1, 1], [], []>} : vector<32x4xbf16>, vector<4x128xbf16>, vector<32x128xf32> -> vector<32x128xf32>
    %27 = arith.truncf %1 : vector<32x4xf32> to vector<32x4xbf16>
    %c1 = arith.constant 1 : index
    %c0_14 = arith.constant 0 : index
    %c0_15 = arith.constant 0 : index
    %28 = vector.load %arg3[%c1, %c0_14, %c0_15] : memref<2x4x128xbf16, #tpu.memory_space<vmem>>, vector<1x4x128xbf16>
    %29 = vector.shape_cast %28 : vector<1x4x128xbf16> to vector<4x128xbf16>
    %cst_16 = arith.constant dense<0.000000e+00> : vector<32x128xf32>
    %30 = tpu.matmul %27, %29, %cst_16 {dimension_numbers = #tpu.dot_dimension_numbers<[1], [0], [0], [1], [0, 0, 1, 1], [], []>} : vector<32x4xbf16>, vector<4x128xbf16>, vector<32x128xf32> -> vector<32x128xf32>
    %31 = arith.addf %26, %30 : vector<32x128xf32>
    %c0_17 = arith.constant 0 : index
    %c0_18 = arith.constant 0 : index
    %32 = vector.load %arg4[%c0_17, %c0_18] : memref<1x128xf32, #tpu.memory_space<vmem>>, vector<1x128xf32>
    %33 = vector.broadcast %32 : vector<1x128xf32> to vector<32x128xf32>
    %34 = arith.addf %31, %33 : vector<32x128xf32>
    %cst_19 = arith.constant 0.000000e+00 : f32
    %35 = vector.broadcast %cst_19 : f32 to vector<32x128xf32>
    %36 = arith.maximumf %34, %35 : vector<32x128xf32>
    %c1_i32_20 = arith.constant 1 : i32
    %37 = tpu.dynamic_rotate %36 by %c1_i32_20 dim 0 : vector<32x128xf32>, i32 -> vector<32x128xf32>
    %cst_21 = arith.constant 0.000000e+00 : f32
    %38 = vector.shape_cast %18 : vector<32x1xi1> to vector<32x1xi1>
    %39 = vector.broadcast %38 : vector<32x1xi1> to vector<32x128xi1>
    %40 = vector.broadcast %cst_21 : f32 to vector<32x128xf32>
    %41 = arith.select %39, %37, %40 : vector<32x128xi1>, vector<32x128xf32>
    %42 = arith.truncf %41 : vector<32x128xf32> to vector<32x128xbf16>
    %43 = arith.truncf %36 : vector<32x128xf32> to vector<32x128xbf16>
    %44 = tpu.concatenate %42, %43 in 1 : vector<32x128xbf16>, vector<32x128xbf16> -> vector<32x256xbf16>
    %c0_22 = arith.constant 0 : index
    %c0_23 = arith.constant 0 : index
    %45 = vector.load %arg5[%c0_22, %c0_23] : memref<256x128xbf16, #tpu.memory_space<vmem>>, vector<256x128xbf16>
    %cst_24 = arith.constant dense<0.000000e+00> : vector<32x128xf32>
    %46 = tpu.matmul %44, %45, %cst_24 {dimension_numbers = #tpu.dot_dimension_numbers<[1], [0], [0], [1], [0, 0, 1, 1], [], []>} : vector<32x256xbf16>, vector<256x128xbf16>, vector<32x128xf32> -> vector<32x128xf32>
    %c0_25 = arith.constant 0 : index
    %c0_26 = arith.constant 0 : index
    %47 = vector.load %arg6[%c0_25, %c0_26] : memref<1x128xf32, #tpu.memory_space<vmem>>, vector<1x128xf32>
    %48 = vector.broadcast %47 : vector<1x128xf32> to vector<32x128xf32>
    %49 = arith.addf %46, %48 : vector<32x128xf32>
    %cst_27 = arith.constant 0.000000e+00 : f32
    %50 = vector.broadcast %cst_27 : f32 to vector<32x128xf32>
    %51 = arith.maximumf %49, %50 : vector<32x128xf32>
    %52 = arith.addf %51, %8 : vector<32x128xf32>
    %cst_28 = arith.constant 0.000000e+00 : f32
    %53 = vector.broadcast %cst_28 : f32 to vector<32x128xf32>
    %54 = arith.maximumf %52, %53 : vector<32x128xf32>
    %55 = arith.truncf %54 : vector<32x128xf32> to vector<32x128xbf16>
    %c0_29 = arith.constant 0 : index
    %c0_30 = arith.constant 0 : index
    %56 = vector.load %arg13[%c0_29, %c0_30] : memref<128x128xbf16, #tpu.memory_space<vmem>>, vector<128x128xbf16>
    %cst_31 = arith.constant dense<0.000000e+00> : vector<32x128xf32>
    %57 = tpu.matmul %55, %56, %cst_31 {dimension_numbers = #tpu.dot_dimension_numbers<[1], [0], [0], [1], [0, 0, 1, 1], [], []>} : vector<32x128xbf16>, vector<128x128xbf16>, vector<32x128xf32> -> vector<32x128xf32>
    %c0_32 = arith.constant 0 : index
    %c0_33 = arith.constant 0 : index
    %58 = vector.load %arg14[%c0_32, %c0_33] : memref<1x128xf32, #tpu.memory_space<vmem>>, vector<1x128xf32>
    %59 = vector.broadcast %58 : vector<1x128xf32> to vector<32x128xf32>
    %60 = arith.addf %57, %59 : vector<32x128xf32>
    %c1_i32_34 = arith.constant 1 : i32
    %61 = tpu.dynamic_rotate %54 by %c1_i32_34 dim 0 : vector<32x128xf32>, i32 -> vector<32x128xf32>
    %cst_35 = arith.constant 0.000000e+00 : f32
    %62 = vector.shape_cast %18 : vector<32x1xi1> to vector<32x1xi1>
    %63 = vector.broadcast %62 : vector<32x1xi1> to vector<32x128xi1>
    %64 = vector.broadcast %cst_35 : f32 to vector<32x128xf32>
    %65 = arith.select %63, %61, %64 : vector<32x128xi1>, vector<32x128xf32>
    %66 = arith.truncf %65 : vector<32x128xf32> to vector<32x128xbf16>
    %c31_i32 = arith.constant 31 : i32
    %67 = tpu.dynamic_rotate %54 by %c31_i32 dim 0 : vector<32x128xf32>, i32 -> vector<32x128xf32>
    %c1_i32_36 = arith.constant 1 : i32
    %68 = vector.broadcast %c1_i32_36 : i32 to vector<32x1xi32>
    %69 = arith.addi %2, %68 : vector<32x1xi32>
    %c0_i32_37 = arith.constant 0 : i32
    %70 = vector.broadcast %c0_i32_37 : i32 to vector<32x1xi32>
    %71 = arith.cmpi sge, %69, %70 : vector<32x1xi32>
    %c1_i32_38 = arith.constant 1 : i32
    %72 = vector.broadcast %c1_i32_38 : i32 to vector<32x1xi32>
    %73 = arith.addi %2, %72 : vector<32x1xi32>
    %c16_i32_39 = arith.constant 16 : i32
    %74 = vector.broadcast %c16_i32_39 : i32 to vector<32x1xi32>
    %75 = arith.cmpi slt, %73, %74 : vector<32x1xi32>
    %76 = arith.andi %71, %75 : vector<32x1xi1>
    %cst_40 = arith.constant 0.000000e+00 : f32
    %77 = vector.shape_cast %76 : vector<32x1xi1> to vector<32x1xi1>
    %78 = vector.broadcast %77 : vector<32x1xi1> to vector<32x128xi1>
    %79 = vector.broadcast %cst_40 : f32 to vector<32x128xf32>
    %80 = arith.select %78, %67, %79 : vector<32x128xi1>, vector<32x128xf32>
    %81 = arith.truncf %80 : vector<32x128xf32> to vector<32x128xbf16>
    %82 = tpu.concatenate %66, %81 in 1 : vector<32x128xbf16>, vector<32x128xbf16> -> vector<32x256xbf16>
    %c0_41 = arith.constant 0 : index
    %c0_42 = arith.constant 0 : index
    %83 = vector.load %arg9[%c0_41, %c0_42] : memref<256x128xbf16, #tpu.memory_space<vmem>>, vector<256x128xbf16>
    %cst_43 = arith.constant dense<0.000000e+00> : vector<32x128xf32>
    %84 = tpu.matmul %82, %83, %cst_43 {dimension_numbers = #tpu.dot_dimension_numbers<[1], [0], [0], [1], [0, 0, 1, 1], [], []>} : vector<32x256xbf16>, vector<256x128xbf16>, vector<32x128xf32> -> vector<32x128xf32>
    %c0_44 = arith.constant 0 : index
    %c0_45 = arith.constant 0 : index
    %85 = vector.load %arg10[%c0_44, %c0_45] : memref<1x128xf32, #tpu.memory_space<vmem>>, vector<1x128xf32>
    %86 = vector.broadcast %85 : vector<1x128xf32> to vector<32x128xf32>
    %87 = arith.addf %84, %86 : vector<32x128xf32>
    %cst_46 = arith.constant 0.000000e+00 : f32
    %88 = vector.broadcast %cst_46 : f32 to vector<32x128xf32>
    %89 = arith.maximumf %87, %88 : vector<32x128xf32>
    %c1_i32_47 = arith.constant 1 : i32
    %90 = tpu.dynamic_rotate %89 by %c1_i32_47 dim 0 : vector<32x128xf32>, i32 -> vector<32x128xf32>
    %cst_48 = arith.constant 0.000000e+00 : f32
    %91 = vector.shape_cast %18 : vector<32x1xi1> to vector<32x1xi1>
    %92 = vector.broadcast %91 : vector<32x1xi1> to vector<32x128xi1>
    %93 = vector.broadcast %cst_48 : f32 to vector<32x128xf32>
    %94 = arith.select %92, %90, %93 : vector<32x128xi1>, vector<32x128xf32>
    %95 = arith.truncf %94 : vector<32x128xf32> to vector<32x128xbf16>
    %c31_i32_49 = arith.constant 31 : i32
    %96 = tpu.dynamic_rotate %89 by %c31_i32_49 dim 0 : vector<32x128xf32>, i32 -> vector<32x128xf32>
    %cst_50 = arith.constant 0.000000e+00 : f32
    %97 = vector.shape_cast %76 : vector<32x1xi1> to vector<32x1xi1>
    %98 = vector.broadcast %97 : vector<32x1xi1> to vector<32x128xi1>
    %99 = vector.broadcast %cst_50 : f32 to vector<32x128xf32>
    %100 = arith.select %98, %96, %99 : vector<32x128xi1>, vector<32x128xf32>
    %101 = arith.truncf %100 : vector<32x128xf32> to vector<32x128xbf16>
    %102 = tpu.concatenate %95, %101 in 1 : vector<32x128xbf16>, vector<32x128xbf16> -> vector<32x256xbf16>
    %c0_51 = arith.constant 0 : index
    %c0_52 = arith.constant 0 : index
    %103 = vector.load %arg11[%c0_51, %c0_52] : memref<256x128xbf16, #tpu.memory_space<vmem>>, vector<256x128xbf16>
    %cst_53 = arith.constant dense<0.000000e+00> : vector<32x128xf32>
    %104 = tpu.matmul %102, %103, %cst_53 {dimension_numbers = #tpu.dot_dimension_numbers<[1], [0], [0], [1], [0, 0, 1, 1], [], []>} : vector<32x256xbf16>, vector<256x128xbf16>, vector<32x128xf32> -> vector<32x128xf32>
    %c0_54 = arith.constant 0 : index
    %c0_55 = arith.constant 0 : index
    %105 = vector.load %arg12[%c0_54, %c0_55] : memref<1x128xf32, #tpu.memory_space<vmem>>, vector<1x128xf32>
    %106 = vector.broadcast %105 : vector<1x128xf32> to vector<32x128xf32>
    %107 = arith.addf %104, %106 : vector<32x128xf32>
    %cst_56 = arith.constant 0.000000e+00 : f32
    %108 = vector.broadcast %cst_56 : f32 to vector<32x128xf32>
    %109 = arith.maximumf %107, %108 : vector<32x128xf32>
    %110 = arith.addf %109, %60 : vector<32x128xf32>
    %cst_57 = arith.constant 0.000000e+00 : f32
    %111 = vector.broadcast %cst_57 : f32 to vector<32x128xf32>
    %112 = arith.maximumf %110, %111 : vector<32x128xf32>
    %113 = arith.truncf %112 : vector<32x128xf32> to vector<32x128xbf16>
    %c0_58 = arith.constant 0 : index
    %c0_59 = arith.constant 0 : index
    %114 = vector.load %arg15[%c0_58, %c0_59] : memref<128x128xbf16, #tpu.memory_space<vmem>>, vector<128x128xbf16>
    %cst_60 = arith.constant dense<0.000000e+00> : vector<32x128xf32>
    %115 = tpu.matmul %113, %114, %cst_60 {dimension_numbers = #tpu.dot_dimension_numbers<[1], [0], [0], [1], [0, 0, 1, 1], [], []>} : vector<32x128xbf16>, vector<128x128xbf16>, vector<32x128xf32> -> vector<32x128xf32>
    %c0_61 = arith.constant 0 : index
    %c0_62 = arith.constant 0 : index
    %116 = vector.load %arg16[%c0_61, %c0_62] : memref<1x128xf32, #tpu.memory_space<vmem>>, vector<1x128xf32>
    %117 = vector.broadcast %116 : vector<1x128xf32> to vector<32x128xf32>
    %118 = arith.addf %115, %117 : vector<32x128xf32>
    %119 = vector.extract_strided_slice %118 {offsets = [0, 0], sizes = [32, 3], strides = [1, 1]} : vector<32x128xf32> to vector<32x3xf32>
    %120 = vector.shape_cast %119 : vector<32x3xf32> to vector<2x16x3xf32>
    %c0_63 = arith.constant 0 : index
    %c0_64 = arith.constant 0 : index
    %c0_65 = arith.constant 0 : index
    %121 = vector.load %arg17[%c0_63, %c0_64, %c0_65] : memref<2x16x3xf32, #tpu.memory_space<vmem>>, vector<2x16x3xf32>
    tpu.vector_store %arg17[%c0_63, %c0_64, %c0_65], %120 {strides = array<i32>} : memref<2x16x3xf32, #tpu.memory_space<vmem>>, vector<2x16x3xf32>,
    return
  }
  func.func @transform_0(%arg0: i32) -> (i32, i32, i32) {
    %c0_i32 = arith.constant 0 : i32
    %c0_i32_0 = arith.constant 0 : i32
    %c0_i32_1 = arith.constant 0 : i32
    return %arg0, %c0_i32, %c0_i32_0 : i32, i32, i32
  }
  func.func @transform_1(%arg0: i32) -> (i32, i32) {
    %c0_i32 = arith.constant 0 : i32
    %c0_i32_0 = arith.constant 0 : i32
    %c0_i32_1 = arith.constant 0 : i32
    return %c0_i32, %c0_i32_0 : i32, i32
  }
  func.func @transform_2(%arg0: i32) -> (i32, i32, i32) {
    %c0_i32 = arith.constant 0 : i32
    %c0_i32_0 = arith.constant 0 : i32
    %c0_i32_1 = arith.constant 0 : i32
    %c0_i32_2 = arith.constant 0 : i32
    return %c0_i32, %c0_i32_0, %c0_i32_1 : i32, i32, i32
  }
  func.func @transform_3(%arg0: i32) -> (i32, i32) {
    %c0_i32 = arith.constant 0 : i32
    %c0_i32_0 = arith.constant 0 : i32
    %c0_i32_1 = arith.constant 0 : i32
    return %c0_i32, %c0_i32_0 : i32, i32
  }
  func.func @transform_4(%arg0: i32) -> (i32, i32) {
    %c0_i32 = arith.constant 0 : i32
    %c0_i32_0 = arith.constant 0 : i32
    %c0_i32_1 = arith.constant 0 : i32
    return %c0_i32, %c0_i32_0 : i32, i32
  }
  func.func @transform_5(%arg0: i32) -> (i32, i32) {
    %c0_i32 = arith.constant 0 : i32
    %c0_i32_0 = arith.constant 0 : i32
    %c0_i32_1 = arith.constant 0 : i32
    return %c0_i32, %c0_i32_0 : i32, i32
  }
  func.func @transform_6(%arg0: i32) -> (i32, i32) {
    %c0_i32 = arith.constant 0 : i32
    %c0_i32_0 = arith.constant 0 : i32
    %c0_i32_1 = arith.constant 0 : i32
    return %c0_i32, %c0_i32_0 : i32, i32
  }
  func.func @transform_7(%arg0: i32) -> (i32, i32) {
    %c0_i32 = arith.constant 0 : i32
    %c0_i32_0 = arith.constant 0 : i32
    %c0_i32_1 = arith.constant 0 : i32
    return %c0_i32, %c0_i32_0 : i32, i32
  }
  func.func @transform_8(%arg0: i32) -> (i32, i32) {
    %c0_i32 = arith.constant 0 : i32
    %c0_i32_0 = arith.constant 0 : i32
    %c0_i32_1 = arith.constant 0 : i32
    return %c0_i32, %c0_i32_0 : i32, i32
  }
  func.func @transform_9(%arg0: i32) -> (i32, i32) {
    %c0_i32 = arith.constant 0 : i32
    %c0_i32_0 = arith.constant 0 : i32
    %c0_i32_1 = arith.constant 0 : i32
    return %c0_i32, %c0_i32_0 : i32, i32
  }
  func.func @transform_10(%arg0: i32) -> (i32, i32) {
    %c0_i32 = arith.constant 0 : i32
    %c0_i32_0 = arith.constant 0 : i32
    %c0_i32_1 = arith.constant 0 : i32
    return %c0_i32, %c0_i32_0 : i32, i32
  }
  func.func @transform_11(%arg0: i32) -> (i32, i32) {
    %c0_i32 = arith.constant 0 : i32
    %c0_i32_0 = arith.constant 0 : i32
    %c0_i32_1 = arith.constant 0 : i32
    return %c0_i32, %c0_i32_0 : i32, i32
  }
  func.func @transform_12(%arg0: i32) -> (i32, i32) {
    %c0_i32 = arith.constant 0 : i32
    %c0_i32_0 = arith.constant 0 : i32
    %c0_i32_1 = arith.constant 0 : i32
    return %c0_i32, %c0_i32_0 : i32, i32
  }
  func.func @transform_13(%arg0: i32) -> (i32, i32) {
    %c0_i32 = arith.constant 0 : i32
    %c0_i32_0 = arith.constant 0 : i32
    %c0_i32_1 = arith.constant 0 : i32
    return %c0_i32, %c0_i32_0 : i32, i32
  }
  func.func @transform_14(%arg0: i32) -> (i32, i32) {
    %c0_i32 = arith.constant 0 : i32
    %c0_i32_0 = arith.constant 0 : i32
    %c0_i32_1 = arith.constant 0 : i32
    return %c0_i32, %c0_i32_0 : i32, i32
  }
  func.func @transform_15(%arg0: i32) -> (i32, i32) {
    %c0_i32 = arith.constant 0 : i32
    %c0_i32_0 = arith.constant 0 : i32
    %c0_i32_1 = arith.constant 0 : i32
    return %c0_i32, %c0_i32_0 : i32, i32
  }
  func.func @transform_16(%arg0: i32) -> (i32, i32, i32) {
    %c0_i32 = arith.constant 0 : i32
    %c0_i32_0 = arith.constant 0 : i32
    %c0_i32_1 = arith.constant 0 : i32
    return %arg0, %c0_i32, %c0_i32_0 : i32, i32, i32
  }
}

</mosaic_0001>

<llo_original>
// kernel: tpu_custom_call.1
$region0: #{tpu_custom_call.1}
  #allocation0 [shape = 'u32[]', space=smem, size = 0x4, offset = 0x4, fixed_abs, tag = 'smem constant byte address 0x4 - core index']
  #allocation1 [shape = 'u32[144,128]{1,0:T(1,128)}', space=vmem, size = 0x12000, scoped, tag = 'internal scratch']
  %s0 = inlined_call_operand.vmem [shape: f32[2,16,4], index: 0, kind: input, shape index: {}]
  %s1 = inlined_call_operand.vmem [shape: s32[32,1], index: 1, kind: input, shape index: {}]
  %s2 = inlined_call_operand.vmem [shape: bf16[2,4,128], index: 2, kind: input, shape index: {}]
  %s3 = inlined_call_operand.vmem [shape: f32[1,128], index: 3, kind: input, shape index: {}]
  %s4 = inlined_call_operand.hbm [shape: bf16[256,128], index: 4, kind: input, shape index: {}]
  %s5 = inlined_call_operand.vmem [shape: f32[1,128], index: 5, kind: input, shape index: {}]
  %s6 = inlined_call_operand.vmem [shape: bf16[4,128], index: 6, kind: input, shape index: {}]
  %s7 = inlined_call_operand.vmem [shape: f32[1,128], index: 7, kind: input, shape index: {}]
  %s8 = inlined_call_operand.hbm [shape: bf16[256,128], index: 8, kind: input, shape index: {}]
  %s9 = inlined_call_operand.vmem [shape: f32[1,128], index: 9, kind: input, shape index: {}]
  %s10 = inlined_call_operand.hbm [shape: bf16[256,128], index: 10, kind: input, shape index: {}]
  %s11 = inlined_call_operand.vmem [shape: f32[1,128], index: 11, kind: input, shape index: {}]
  %s12 = inlined_call_operand.vmem [shape: bf16[128,128], index: 12, kind: input, shape index: {}]
  %s13 = inlined_call_operand.vmem [shape: f32[1,128], index: 13, kind: input, shape index: {}]
  %s14 = inlined_call_operand.hbm [shape: bf16[128,128], index: 14, kind: input, shape index: {}]
  %s15 = inlined_call_operand.vmem [shape: f32[1,128], index: 15, kind: input, shape index: {}]
  %s16 = inlined_call_operand.vmem [shape: f32[2,16,3], index: 16, kind: output, shape index: {}]
  %s17 = sld [smem:[#allocation0]]
  $region90: #{tpu_custom_call.1} parent=0
    _
  %s19 = ssub.s32 1, %s17
  %s20 = scalar_select 0, %s19, %s17
  $region1: #{tpu_custom_call.1} parent=0
    #allocation2 [shape = 'u8[65536]{0}', space=vmem, size = 0x10000, scoped, tag = 'input window, operand 4, single buffered']
    #allocation3 [shape = 's32[1]{0}', space=sflag, size = 0x4, scoped, tag = 'scoped memory for tpu_custom_call.1']
    #allocation4 [shape = 'u8[65536]{0}', space=vmem, size = 0x10000, scoped, tag = 'input window, operand 8, single buffered']
    #allocation5 [shape = 's32[1]{0}', space=sflag, size = 0x4, scoped, tag = 'scoped memory for tpu_custom_call.1']
    #allocation6 [shape = 'u8[65536]{0}', space=vmem, size = 0x10000, scoped, tag = 'input window, operand 10, single buffered']
    #allocation7 [shape = 'u8[32768]{0}', space=vmem, size = 0x8000, scoped, tag = 'input window, operand 14, single buffered']
    #allocation8 [shape = 's32[1]{0}', space=sflag, size = 0x4, scoped, tag = 'scoped memory for tpu_custom_call.1']
    %21 = vsyncpa [#allocation3], 0
    %22 = vsyncpa [#allocation5], 0
    %23 = vsyncpa [#allocation8], 0
    // Predicated region
    $region2: #{tpu_custom_call.1} parent=1 // pred_check
      _
    $region3: #{tpu_custom_call.1} parent=1 // pred_check_branch
      %25 = sbr.rel (0) target = $region5
    $region4: #{tpu_custom_call.1} parent=1 // pred_region
      _
    $region5: #{tpu_custom_call.1} parent=1 // pred_fallthru
      _
    // Predicated region
    $region6: #{tpu_custom_call.1} parent=1 // pred_check
      _
    $region7: #{tpu_custom_call.1} parent=1 // pred_check_branch
      %27 = sbr.rel (0) target = $region9
    $region8: #{tpu_custom_call.1} parent=1 // pred_region
      _
    $region9: #{tpu_custom_call.1} parent=1 // pred_fallthru
      _
    // Predicated region
    $region10: #{tpu_custom_call.1} parent=1 // pred_check
      _
    $region11: #{tpu_custom_call.1} parent=1 // pred_check_branch
      %29 = sbr.rel (0) target = $region13
    $region12: #{tpu_custom_call.1} parent=1 // pred_region
      _
    $region13: #{tpu_custom_call.1} parent=1 // pred_fallthru
      _
    // Predicated region
    $region14: #{tpu_custom_call.1} parent=1 // pred_check
      _
    $region15: #{tpu_custom_call.1} parent=1 // pred_check_branch
      %31 = sbr.rel (0) target = $region17
    $region16: #{tpu_custom_call.1} parent=1 // pred_region
      _
    $region17: #{tpu_custom_call.1} parent=1 // pred_fallthru
      _
    // Predicated region
    $region18: #{tpu_custom_call.1} parent=1 // pred_check
      _
    $region19: #{tpu_custom_call.1} parent=1 // pred_check_branch
      %33 = sbr.rel (0) target = $region21
    $region20: #{tpu_custom_call.1} parent=1 // pred_region
      %s35 = ssub.s32 2048, 2048
      %36 = vsyncadd [#allocation3], %s35
      %s37 = sshll.u32 [#allocation2], 4
      %s38 = int_to_ptr.vmem [resolvable:$true] %s37
      %43 = dma.hbm_to_vmem [thread:$0]  %s4, 2048, %s38, [#allocation3], 64, 64, 4
    $region21: #{tpu_custom_call.1} parent=1 // pred_fallthru
      _
    // Predicated region
    $region22: #{tpu_custom_call.1} parent=1 // pred_check
      _
    $region23: #{tpu_custom_call.1} parent=1 // pred_check_branch
      %45 = sbr.rel (0) target = $region25
    $region24: #{tpu_custom_call.1} parent=1 // pred_region
      _
    $region25: #{tpu_custom_call.1} parent=1 // pred_fallthru
      _
    // Predicated region
    $region26: #{tpu_custom_call.1} parent=1 // pred_check
      _
    $region27: #{tpu_custom_call.1} parent=1 // pred_check_branch
      %47 = sbr.rel (0) target = $region29
    $region28: #{tpu_custom_call.1} parent=1 // pred_region
      _
    $region29: #{tpu_custom_call.1} parent=1 // pred_fallthru
      _
    // Predicated region
    $region30: #{tpu_custom_call.1} parent=1 // pred_check
      _
    $region31: #{tpu_custom_call.1} parent=1 // pred_check_branch
      %49 = sbr.rel (0) target = $region33
    $region32: #{tpu_custom_call.1} parent=1 // pred_region
      _
    $region33: #{tpu_custom_call.1} parent=1 // pred_fallthru
      _
    // Predicated region
    $region34: #{tpu_custom_call.1} parent=1 // pred_check
      _
    $region35: #{tpu_custom_call.1} parent=1 // pred_check_branch
      %51 = sbr.rel (0) target = $region37
    $region36: #{tpu_custom_call.1} parent=1 // pred_region
      %s53 = ssub.s32 2048, 2048
      %54 = vsyncadd [#allocation5], %s53
      %s55 = sshll.u32 [#allocation4], 4
      %s56 = int_to_ptr.vmem [resolvable:$true] %s55
      %61 = dma.hbm_to_vmem [thread:$0]  %s8, 2048, %s56, [#allocation5], 64, 64, 4
    $region37: #{tpu_custom_call.1} parent=1 // pred_fallthru
      _
    // Predicated region
    $region38: #{tpu_custom_call.1} parent=1 // pred_check
      _
    $region39: #{tpu_custom_call.1} parent=1 // pred_check_branch
      %63 = sbr.rel (0) target = $region41
    $region40: #{tpu_custom_call.1} parent=1 // pred_region
      _
    $region41: #{tpu_custom_call.1} parent=1 // pred_fallthru
      _
    // Predicated region
    $region42: #{tpu_custom_call.1} parent=1 // pred_check
      _
    $region43: #{tpu_custom_call.1} parent=1 // pred_check_branch
      %65 = sbr.rel (0) target = $region45
    $region44: #{tpu_custom_call.1} parent=1 // pred_region
      %s67 = ssub.s32 2048, 2048
      %68 = vsyncadd [#allocation5], %s67
      %s69 = sshll.u32 [#allocation6], 4
      %s70 = int_to_ptr.vmem [resolvable:$true] %s69
      %75 = dma.hbm_to_vmem [thread:$0]  %s10, 2048, %s70, [#allocation5], 64, 64, 4
    $region45: #{tpu_custom_call.1} parent=1 // pred_fallthru
      _
    // Predicated region
    $region46: #{tpu_custom_call.1} parent=1 // pred_check
      _
    $region47: #{tpu_custom_call.1} parent=1 // pred_check_branch
      %77 = sbr.rel (0) target = $region49
    $region48: #{tpu_custom_call.1} parent=1 // pred_region
      _
    $region49: #{tpu_custom_call.1} parent=1 // pred_fallthru
      _
    // Predicated region
    $region50: #{tpu_custom_call.1} parent=1 // pred_check
      _
    $region51: #{tpu_custom_call.1} parent=1 // pred_check_branch
      %79 = sbr.rel (0) target = $region53
    $region52: #{tpu_custom_call.1} parent=1 // pred_region
      _
    $region53: #{tpu_custom_call.1} parent=1 // pred_fallthru
      _
    // Predicated region
    $region54: #{tpu_custom_call.1} parent=1 // pred_check
      _
    $region55: #{tpu_custom_call.1} parent=1 // pred_check_branch
      %81 = sbr.rel (0) target = $region57
    $region56: #{tpu_custom_call.1} parent=1 // pred_region
      _
    $region57: #{tpu_custom_call.1} parent=1 // pred_fallthru
      _
    // Predicated region
    $region58: #{tpu_custom_call.1} parent=1 // pred_check
      _
    $region59: #{tpu_custom_call.1} parent=1 // pred_check_branch
      %83 = sbr.rel (0) target = $region61
    $region60: #{tpu_custom_call.1} parent=1 // pred_region
      %s85 = ssub.s32 1024, 1024
      %86 = vsyncadd [#allocation8], %s85
      %s87 = sshll.u32 [#allocation7], 4
      %s88 = int_to_ptr.vmem [resolvable:$true] %s87
      %93 = dma.hbm_to_vmem [thread:$0]  %s14, 1024, %s88, [#allocation8], 64, 64, 4
    $region61: #{tpu_custom_call.1} parent=1 // pred_fallthru
      _
    // Predicated region
    $region62: #{tpu_custom_call.1} parent=1 // pred_check
      _
    $region63: #{tpu_custom_call.1} parent=1 // pred_check_branch
      %95 = sbr.rel (0) target = $region65
    $region64: #{tpu_custom_call.1} parent=1 // pred_region
      _
    $region65: #{tpu_custom_call.1} parent=1 // pred_fallthru
      _
    // Predicated region
    $region66: #{tpu_custom_call.1} parent=1 // pred_check
      _
    $region67: #{tpu_custom_call.1} parent=1 // pred_check_branch
      %97 = sbr.rel (0) target = $region69
    $region68: #{tpu_custom_call.1} parent=1 // pred_region
      %98 = dma.done [#allocation3], 2048
    $region69: #{tpu_custom_call.1} parent=1 // pred_fallthru
      _
    // Predicated region
    $region70: #{tpu_custom_call.1} parent=1 // pred_check
      _
    $region71: #{tpu_custom_call.1} parent=1 // pred_check_branch
      %100 = sbr.rel (0) target = $region73
    $region72: #{tpu_custom_call.1} parent=1 // pred_region
      %101 = dma.done [#allocation5], 2048
    $region73: #{tpu_custom_call.1} parent=1 // pred_fallthru
      _
    // Predicated region
    $region74: #{tpu_custom_call.1} parent=1 // pred_check
      _
    $region75: #{tpu_custom_call.1} parent=1 // pred_check_branch
      %103 = sbr.rel (0) target = $region77
    $region76: #{tpu_custom_call.1} parent=1 // pred_region
      %104 = dma.done [#allocation5], 2048
    $region77: #{tpu_custom_call.1} parent=1 // pred_fallthru
      _
    // Predicated region
    $region78: #{tpu_custom_call.1} parent=1 // pred_check
      _
    $region79: #{tpu_custom_call.1} parent=1 // pred_check_branch
      %106 = sbr.rel (0) target = $region81
    $region80: #{tpu_custom_call.1} parent=1 // pred_region
      %107 = dma.done [#allocation8], 1024
    $region81: #{tpu_custom_call.1} parent=1 // pred_fallthru
      _
    %v109 = vld [vmem:[%s0] sm:$0xff]
    %v110 = vld [vmem:[%s0 + $0x8] sm:$0xff]
    %v111 = vld [vmem:[%s0 + $0x10] sm:$0xff]
    %v112 = vld [vmem:[%s0 + $0x18] sm:$0xff]
    %v113 = vld [vmem:[%s1] sm:$0xff]
    %v114 = vld [vmem:[%s1 + $0x8] sm:$0xff]
    %v115 = vld [vmem:[%s1 + $0x10] sm:$0xff]
    %v116 = vld [vmem:[%s1 + $0x18] sm:$0xff]
    %v117 = vpack.c.bf16 %v110, %v109
    %v118 = vpack.c.bf16 %v112, %v111
    %v119 = vld [vmem:[%s6] sm:$0x3]
    %v120 = vld [vmem:[%s7] sm:$0x1]
    %v122 = vlaneseq
    %v123 = vshrl.u32 %v122, 7
    %v124 = vsub.s32 0, %v123
    %v125 = vrot.slane %v120, %v124
    %vm127 = vcmask 31744
    %v129 = vsel %vm127, %v117, 0
    %v132 = vsel %vm127, %v118, 0
    %vm134 = vcmask 1041408
    %v136 = vsel %vm134, %v119, 0
    %138 = vmatprep.subr.bf16.mxu0 0
    %139 = vmatpush1.bf16.msra.mxu0 0
    %140 = vmatprep.subr.bf16.mxu0 0
    %141 = vmatpush1.bf16.msra.mxu0 0
    %142 = vmatprep.subr.bf16.mxu0 0
    %143 = vmatpush1.bf16.msra.mxu0 0
    %144 = vmatprep.subr.bf16.mxu0 0
    %145 = vmatpush1.bf16.msra.mxu0 0
    %146 = vmatprep.subr.bf16.mxu0 0
    %147 = vmatpush1.bf16.msra.mxu0 0
    %148 = vmatprep.subr.bf16.mxu0 0
    %149 = vmatpush1.bf16.msra.mxu0 0
    %150 = vmatprep.subr.bf16.mxu0 0
    %151 = vmatpush1.bf16.msra.mxu0 0
    %152 = vmatprep.subr.bf16.mxu0 0
    %153 = vmatpush1.bf16.msra.mxu0 %v136
    %154 = vmatprep.subr.bf16.mxu0 0
    %155 = vmatpush2.bf16.msra.mxu0 0
    %156 = vmatprep.subr.bf16.mxu0 0
    %157 = vmatpush2.bf16.msra.mxu0 0
    %158 = vmatprep.subr.bf16.mxu0 0
    %159 = vmatpush2.bf16.msra.mxu0 0
    %160 = vmatprep.subr.bf16.mxu0 0
    %161 = vmatpush2.bf16.msra.mxu0 0
    %162 = vmatprep.subr.bf16.mxu0 0
    %163 = vmatpush2.bf16.msra.mxu0 0
    %164 = vmatprep.subr.bf16.mxu0 0
    %165 = vmatpush2.bf16.msra.mxu0 0
    %166 = vmatprep.subr.bf16.mxu0 0
    %167 = vmatpush2.bf16.msra.mxu0 0
    %168 = vmatprep.subr.bf16.mxu0 0
    %169 = vmatpush2.bf16.msra.mxu0 0
    %170 = vmatprep.mubr.bf16.mxu0 0
    %171 = vmatmul.mubr.bf16.gmra.mxu0 %v129
    %v172 = vpop.f32.mrf.mxu0
    %v173 = vadd.f32 %v125, %v172
    %v174 = vpop.f32.mrf.mxu0
    %v175 = vpop.f32.mrf.mxu0
    %v176 = vadd.f32 %v125, %v175
    %v177 = vpop.f32.mrf.mxu0
    %178 = vmatprep.mubr.bf16.mxu0 0
    %179 = vmatmul.mubr.bf16.gmra.mxu0 %v132
    %v180 = vpop.f32.mrf.mxu0
    %v181 = vadd.f32 %v125, %v180
    %v182 = vpop.f32.mrf.mxu0
    %v183 = vpop.f32.mrf.mxu0
    %v184 = vadd.f32 %v125, %v183
    %v185 = vpop.f32.mrf.mxu0
    %186 = vdwg.mxu0
    %v187 = vrot.slane %v109, 7
    %v188 = vrot.slane %v110, 7
    %v189 = vrot.slane %v111, 7
    %v190 = vrot.slane %v112, 7
    %v191 = vlaneseq
    %v192 = vshrl.u32 %v191, 7
    %vm193 = vcmp.lt.s32.totalorder %v192, 1
    %v194 = vsel %vm193, %v189, %v190
    %v195 = vsel %vm193, %v188, %v189
    %v196 = vsel %vm193, %v187, %v188
    %v197 = vsel %vm193, %v190, %v187
    %v198 = vadd.s32 %v113, 4294967295
    %v199 = vadd.s32 %v114, 4294967295
    %v200 = vadd.s32 %v115, 4294967295
    %v201 = vadd.s32 %v116, 4294967295
    %vm202 = vcmp.ge.s32.totalorder %v198, 0
    %vm203 = vcmp.ge.s32.totalorder %v199, 0
    %vm204 = vcmp.ge.s32.totalorder %v200, 0
    %vm205 = vcmp.ge.s32.totalorder %v201, 0
    %vm206 = vcmp.lt.s32.totalorder %v198, 16
    %vm207 = vcmp.lt.s32.totalorder %v199, 16
    %vm208 = vcmp.lt.s32.totalorder %v200, 16
    %vm209 = vcmp.lt.s32.totalorder %v201, 16
    %vm210 = vmand %vm202, %vm206
    %vm211 = vmand %vm203, %vm207
    %vm212 = vmand %vm204, %vm208
    %vm213 = vmand %vm205, %vm209
    %v214 = vsel %vm210, 1, 0
    %v215 = vsel %vm211, 1, 0
    %v216 = vsel %vm212, 1, 0
    %v217 = vsel %vm213, 1, 0
    %218 = vset.pattern.permute.xlu0 0
    %219 = vperm.xlu0 %218, %v214
    %v220 = vpop.permute.xlu0 %219
    %221 = vset.pattern.permute.xlu0 0
    %222 = vperm.xlu0 %221, %v215
    %v223 = vpop.permute.xlu0 %222
    %224 = vset.pattern.permute.xlu0 0
    %225 = vperm.xlu0 %224, %v216
    %v226 = vpop.permute.xlu0 %225
    %227 = vset.pattern.permute.xlu0 0
    %228 = vperm.xlu0 %227, %v217
    %v229 = vpop.permute.xlu0 %228
    %vm230 = vcmp.eq.s32.totalorder %v220, 1
    %vm231 = vcmp.eq.s32.totalorder %v223, 1
    %vm232 = vcmp.eq.s32.totalorder %v226, 1
    %vm233 = vcmp.eq.s32.totalorder %v229, 1
    %v234 = vsel %vm230, %v197, 0.0
    %v235 = vsel %vm231, %v196, 0.0
    %v236 = vsel %vm232, %v195, 0.0
    %v237 = vsel %vm233, %v194, 0.0
    %v238 = vpack.c.bf16 %v235, %v234
    %v239 = vpack.c.bf16 %v237, %v236
    %v240 = vld [vmem:[%s2] sm:$0x3]
    %s241 = scalar_lea.vmem %s2, 2
    %v242 = vld [vmem:[%s241] sm:$0x3]
    %v244 = vsel %vm134, %v242, 0
    %246 = vmatprep.subr.bf16.mxu0 0
    %247 = vmatpush1.bf16.msra.mxu0 0
    %248 = vmatprep.subr.bf16.mxu0 0
    %249 = vmatpush1.bf16.msra.mxu0 0
    %250 = vmatprep.subr.bf16.mxu0 0
    %251 = vmatpush1.bf16.msra.mxu0 0
    %252 = vmatprep.subr.bf16.mxu0 0
    %253 = vmatpush1.bf16.msra.mxu0 0
    %254 = vmatprep.subr.bf16.mxu0 0
    %255 = vmatpush1.bf16.msra.mxu0 0
    %256 = vmatprep.subr.bf16.mxu0 0
    %257 = vmatpush1.bf16.msra.mxu0 0
    %258 = vmatprep.subr.bf16.mxu0 0
    %259 = vmatpush1.bf16.msra.mxu0 0
    %260 = vmatprep.subr.bf16.mxu0 0
    %261 = vmatpush1.bf16.msra.mxu0 %v244
    %262 = vmatprep.subr.bf16.mxu0 0
    %263 = vmatpush2.bf16.msra.mxu0 0
    %264 = vmatprep.subr.bf16.mxu0 0
    %265 = vmatpush2.bf16.msra.mxu0 0
    %266 = vmatprep.subr.bf16.mxu0 0
    %267 = vmatpush2.bf16.msra.mxu0 0
    %268 = vmatprep.subr.bf16.mxu0 0
    %269 = vmatpush2.bf16.msra.mxu0 0
    %270 = vmatprep.subr.bf16.mxu0 0
    %271 = vmatpush2.bf16.msra.mxu0 0
    %272 = vmatprep.subr.bf16.mxu0 0
    %273 = vmatpush2.bf16.msra.mxu0 0
    %274 = vmatprep.subr.bf16.mxu0 0
    %275 = vmatpush2.bf16.msra.mxu0 0
    %276 = vmatprep.subr.bf16.mxu0 0
    %277 = vmatpush2.bf16.msra.mxu0 0
    %278 = vmatprep.mubr.bf16.mxu0 0
    %279 = vmatmul.mubr.bf16.gmra.mxu0 %v129
    %v280 = vpop.f32.mrf.mxu0
    %v281 = vadd.f32 0.0, %v280
    %v282 = vpop.f32.mrf.mxu0
    %v283 = vpop.f32.mrf.mxu0
    %v284 = vadd.f32 0.0, %v283
    %v285 = vpop.f32.mrf.mxu0
    %286 = vmatprep.mubr.bf16.mxu0 0
    %287 = vmatmul.mubr.bf16.gmra.mxu0 %v132
    %v288 = vpop.f32.mrf.mxu0
    %v289 = vadd.f32 0.0, %v288
    %v290 = vpop.f32.mrf.mxu0
    %v291 = vpop.f32.mrf.mxu0
    %v292 = vadd.f32 0.0, %v291
    %v293 = vpop.f32.mrf.mxu0
    %294 = vdwg.mxu0
    %v296 = vsel %vm127, %v238, 0
    %v299 = vsel %vm127, %v239, 0
    %v302 = vsel %vm134, %v240, 0
    %304 = vmatprep.subr.bf16.mxu0 0
    %305 = vmatpush1.bf16.msra.mxu0 0
    %306 = vmatprep.subr.bf16.mxu0 0
    %307 = vmatpush1.bf16.msra.mxu0 0
    %308 = vmatprep.subr.bf16.mxu0 0
    %309 = vmatpush1.bf16.msra.mxu0 0
    %310 = vmatprep.subr.bf16.mxu0 0
    %311 = vmatpush1.bf16.msra.mxu0 0
    %312 = vmatprep.subr.bf16.mxu0 0
    %313 = vmatpush1.bf16.msra.mxu0 0
    %314 = vmatprep.subr.bf16.mxu0 0
    %315 = vmatpush1.bf16.msra.mxu0 0
    %316 = vmatprep.subr.bf16.mxu0 0
    %317 = vmatpush1.bf16.msra.mxu0 0
    %318 = vmatprep.subr.bf16.mxu0 0
    %319 = vmatpush1.bf16.msra.mxu0 %v302
    %320 = vmatprep.subr.bf16.mxu0 0
    %321 = vmatpush2.bf16.msra.mxu0 0
    %322 = vmatprep.subr.bf16.mxu0 0
    %323 = vmatpush2.bf16.msra.mxu0 0
    %324 = vmatprep.subr.bf16.mxu0 0
    %325 = vmatpush2.bf16.msra.mxu0 0
    %326 = vmatprep.subr.bf16.mxu0 0
    %327 = vmatpush2.bf16.msra.mxu0 0
    %328 = vmatprep.subr.bf16.mxu0 0
    %329 = vmatpush2.bf16.msra.mxu0 0
    %330 = vmatprep.subr.bf16.mxu0 0
    %331 = vmatpush2.bf16.msra.mxu0 0
    %332 = vmatprep.subr.bf16.mxu0 0
    %333 = vmatpush2.bf16.msra.mxu0 0
    %334 = vmatprep.subr.bf16.mxu0 0
    %335 = vmatpush2.bf16.msra.mxu0 0
    %336 = vmatprep.mubr.bf16.mxu0 0
    %337 = vmatmul.mubr.bf16.gmra.mxu0 %v296
    %v338 = vpop.f32.mrf.mxu0
    %v339 = vadd.f32 %v281, %v338
    %v340 = vpop.f32.mrf.mxu0
    %v341 = vpop.f32.mrf.mxu0
    %v342 = vadd.f32 %v284, %v341
    %v343 = vpop.f32.mrf.mxu0
    %344 = vmatprep.mubr.bf16.mxu0 0
    %345 = vmatmul.mubr.bf16.gmra.mxu0 %v299
    %v346 = vpop.f32.mrf.mxu0
    %v347 = vadd.f32 %v289, %v346
    %v348 = vpop.f32.mrf.mxu0
    %v349 = vpop.f32.mrf.mxu0
    %v350 = vadd.f32 %v292, %v349
    %v351 = vpop.f32.mrf.mxu0
    %352 = vdwg.mxu0
    %v353 = vld [vmem:[%s3] sm:$0x1]
    %v355 = vlaneseq
    %v356 = vshrl.u32 %v355, 7
    %v357 = vsub.s32 0, %v356
    %v358 = vrot.slane %v353, %v357
    %v360 = vadd.f32 %v339, %v358
    %v361 = vadd.f32 %v342, %v358
    %v362 = vadd.f32 %v347, %v358
    %v363 = vadd.f32 %v350, %v358
    %v364 = vmax.f32 %v360, 0.0
    %v365 = vmax.f32 %v361, 0.0
    %v366 = vmax.f32 %v362, 0.0
    %v367 = vmax.f32 %v363, 0.0
    %v368 = vrot.slane %v364, 7
    %v369 = vrot.slane %v365, 7
    %v370 = vrot.slane %v366, 7
    %v371 = vrot.slane %v367, 7
    %v372 = vsel %vm193, %v370, %v371
    %v373 = vsel %vm193, %v369, %v370
    %v374 = vsel %vm193, %v368, %v369
    %v375 = vsel %vm193, %v371, %v368
    %v376 = vsel %vm230, %v375, 0.0
    %v377 = vsel %vm231, %v374, 0.0
    %v378 = vsel %vm232, %v373, 0.0
    %v379 = vsel %vm233, %v372, 0.0
    %v380 = vpack.c.bf16 %v377, %v376
    %v381 = vpack.c.bf16 %v379, %v378
    %v382 = vpack.c.bf16 %v365, %v364
    %v383 = vpack.c.bf16 %v367, %v366
    %v384 = vld [vmem:[#allocation2] sm:$0xf]
    %v385 = vld [vmem:[#allocation2 + $0x4] sm:$0xf]
    %v386 = vld [vmem:[#allocation2 + $0x8] sm:$0xf]
    %v387 = vld [vmem:[#allocation2 + $0xc] sm:$0xf]
    %v388 = vld [vmem:[#allocation2 + $0x10] sm:$0xf]
    %v389 = vld [vmem:[#allocation2 + $0x14] sm:$0xf]
    %v390 = vld [vmem:[#allocation2 + $0x18] sm:$0xf]
    %v391 = vld [vmem:[#allocation2 + $0x1c] sm:$0xf]
    %v392 = vld [vmem:[#allocation2 + $0x20] sm:$0xf]
    %v393 = vld [vmem:[#allocation2 + $0x24] sm:$0xf]
    %v394 = vld [vmem:[#allocation2 + $0x28] sm:$0xf]
    %v395 = vld [vmem:[#allocation2 + $0x2c] sm:$0xf]
    %v396 = vld [vmem:[#allocation2 + $0x30] sm:$0xf]
    %v397 = vld [vmem:[#allocation2 + $0x34] sm:$0xf]
    %v398 = vld [vmem:[#allocation2 + $0x38] sm:$0xf]
    %v399 = vld [vmem:[#allocation2 + $0x3c] sm:$0xf]
    %v400 = vld [vmem:[#allocation2 + $0x40] sm:$0xf]
    %v401 = vld [vmem:[#allocation2 + $0x44] sm:$0xf]
    %v402 = vld [vmem:[#allocation2 + $0x48] sm:$0xf]
    %v403 = vld [vmem:[#allocation2 + $0x4c] sm:$0xf]
    %v404 = vld [vmem:[#allocation2 + $0x50] sm:$0xf]
    %v405 = vld [vmem:[#allocation2 + $0x54] sm:$0xf]
    %v406 = vld [vmem:[#allocation2 + $0x58] sm:$0xf]
    %v407 = vld [vmem:[#allocation2 + $0x5c] sm:$0xf]
    %v408 = vld [vmem:[#allocation2 + $0x60] sm:$0xf]
    %v409 = vld [vmem:[#allocation2 + $0x64] sm:$0xf]
    %v410 = vld [vmem:[#allocation2 + $0x68] sm:$0xf]
    %v411 = vld [vmem:[#allocation2 + $0x6c] sm:$0xf]
    %v412 = vld [vmem:[#allocation2 + $0x70] sm:$0xf]
    %v413 = vld [vmem:[#allocation2 + $0x74] sm:$0xf]
    %v414 = vld [vmem:[#allocation2 + $0x78] sm:$0xf]
    %v415 = vld [vmem:[#allocation2 + $0x7c] sm:$0xf]
    %v416 = vld [vmem:[%s5] sm:$0x1]
    %v418 = vlaneseq
    %v419 = vshrl.u32 %v418, 7
    %v420 = vsub.s32 0, %v419
    %v421 = vrot.slane %v416, %v420
    %v455 = vunpack.c.l.b16 %v384
    %v456 = vunpack.c.l.b16 %v385
    %v457 = vunpack.c.l.b16 %v386
    %v458 = vunpack.c.l.b16 %v387
    %v459 = vunpack.c.l.b16 %v388
    %v460 = vunpack.c.l.b16 %v389
    %v461 = vunpack.c.l.b16 %v390
    %v462 = vunpack.c.l.b16 %v391
    %v463 = vunpack.c.l.b16 %v392
    %v464 = vunpack.c.l.b16 %v393
    %v465 = vunpack.c.l.b16 %v394
    %v466 = vunpack.c.l.b16 %v395
    %v467 = vunpack.c.l.b16 %v396
    %v468 = vunpack.c.l.b16 %v397
    %v469 = vunpack.c.l.b16 %v398
    %v470 = vunpack.c.l.b16 %v399
    %v471 = vunpack.c.l.b16 %v400
    %v472 = vunpack.c.l.b16 %v401
    %v473 = vunpack.c.l.b16 %v402
    %v474 = vunpack.c.l.b16 %v403
    %v475 = vunpack.c.l.b16 %v404
    %v476 = vunpack.c.l.b16 %v405
    %v477 = vunpack.c.l.b16 %v406
    %v478 = vunpack.c.l.b16 %v407
    %v479 = vunpack.c.l.b16 %v408
    %v480 = vunpack.c.l.b16 %v409
    %v481 = vunpack.c.l.b16 %v410
    %v482 = vunpack.c.l.b16 %v411
    %v483 = vunpack.c.l.b16 %v412
    %v484 = vunpack.c.l.b16 %v413
    %v485 = vunpack.c.l.b16 %v414
    %v486 = vunpack.c.l.b16 %v415
    %v487 = vpack.c.b16 %v456, %v455
    %v488 = vpack.c.b16 %v458, %v457
    %v489 = vpack.c.b16 %v460, %v459
    %v490 = vpack.c.b16 %v462, %v461
    %v491 = vpack.c.b16 %v464, %v463
    %v492 = vpack.c.b16 %v466, %v465
    %v493 = vpack.c.b16 %v468, %v467
    %v494 = vpack.c.b16 %v470, %v469
    %v495 = vpack.c.b16 %v472, %v471
    %v496 = vpack.c.b16 %v474, %v473
    %v497 = vpack.c.b16 %v476, %v475
    %v498 = vpack.c.b16 %v478, %v477
    %v499 = vpack.c.b16 %v480, %v479
    %v500 = vpack.c.b16 %v482, %v481
    %v501 = vpack.c.b16 %v484, %v483
    %v502 = vpack.c.b16 %v486, %v485
    %519 = vmatprep.subr.bf16.mxu0 0
    %520 = vmatpush1.bf16.msra.mxu0 %v494
    %521 = vmatprep.subr.bf16.mxu0 0
    %522 = vmatpush1.bf16.msra.mxu0 %v493
    %523 = vmatprep.subr.bf16.mxu0 0
    %524 = vmatpush1.bf16.msra.mxu0 %v492
    %525 = vmatprep.subr.bf16.mxu0 0
    %526 = vmatpush1.bf16.msra.mxu0 %v491
    %527 = vmatprep.subr.bf16.mxu0 0
    %528 = vmatpush1.bf16.msra.mxu0 %v490
    %529 = vmatprep.subr.bf16.mxu0 0
    %530 = vmatpush1.bf16.msra.mxu0 %v489
    %531 = vmatprep.subr.bf16.mxu0 0
    %532 = vmatpush1.bf16.msra.mxu0 %v488
    %533 = vmatprep.subr.bf16.mxu0 0
    %534 = vmatpush1.bf16.msra.mxu0 %v487
    %535 = vmatprep.subr.bf16.mxu0 0
    %536 = vmatpush2.bf16.msra.mxu0 %v502
    %537 = vmatprep.subr.bf16.mxu0 0
    %538 = vmatpush2.bf16.msra.mxu0 %v501
    %539 = vmatprep.subr.bf16.mxu0 0
    %540 = vmatpush2.bf16.msra.mxu0 %v500
    %541 = vmatprep.subr.bf16.mxu0 0
    %542 = vmatpush2.bf16.msra.mxu0 %v499
    %543 = vmatprep.subr.bf16.mxu0 0
    %544 = vmatpush2.bf16.msra.mxu0 %v498
    %545 = vmatprep.subr.bf16.mxu0 0
    %546 = vmatpush2.bf16.msra.mxu0 %v497
    %547 = vmatprep.subr.bf16.mxu0 0
    %548 = vmatpush2.bf16.msra.mxu0 %v496
    %549 = vmatprep.subr.bf16.mxu0 0
    %550 = vmatpush2.bf16.msra.mxu0 %v495
    %551 = vmatprep.mubr.bf16.mxu0 %v382
    %552 = vmatmul.mubr.bf16.gmra.mxu0 %v380
    %v553 = vpop.f32.mrf.mxu0
    %v554 = vadd.f32 %v421, %v553
    %v555 = vpop.f32.mrf.mxu0
    %v556 = vpop.f32.mrf.mxu0
    %v557 = vadd.f32 %v421, %v556
    %v558 = vpop.f32.mrf.mxu0
    %559 = vmatprep.mubr.bf16.mxu0 %v383
    %560 = vmatmul.mubr.bf16.gmra.mxu0 %v381
    %v561 = vpop.f32.mrf.mxu0
    %v562 = vadd.f32 %v421, %v561
    %v563 = vpop.f32.mrf.mxu0
    %v564 = vpop.f32.mrf.mxu0
    %v565 = vadd.f32 %v421, %v564
    %v566 = vpop.f32.mrf.mxu0
    %567 = vdwg.mxu0
    %v568 = vmax.f32 %v554, 0.0
    %v569 = vmax.f32 %v557, 0.0
    %v570 = vmax.f32 %v562, 0.0
    %v571 = vmax.f32 %v565, 0.0
    %v572 = vadd.f32 %v568, %v173
    %v573 = vadd.f32 %v569, %v176
    %v574 = vadd.f32 %v570, %v181
    %v575 = vadd.f32 %v571, %v184
    %v576 = vmax.f32 %v572, 0.0
    %v577 = vmax.f32 %v573, 0.0
    %v578 = vmax.f32 %v574, 0.0
    %v579 = vmax.f32 %v575, 0.0
    %v580 = vpack.c.bf16 %v577, %v576
    %v581 = vpack.c.bf16 %v579, %v578
    %v582 = vld [vmem:[%s12] sm:$0xf]
    %v583 = vld [vmem:[%s12 + $0x4] sm:$0xf]
    %v584 = vld [vmem:[%s12 + $0x8] sm:$0xf]
    %v585 = vld [vmem:[%s12 + $0xc] sm:$0xf]
    %v586 = vld [vmem:[%s12 + $0x10] sm:$0xf]
    %v587 = vld [vmem:[%s12 + $0x14] sm:$0xf]
    %v588 = vld [vmem:[%s12 + $0x18] sm:$0xf]
    %v589 = vld [vmem:[%s12 + $0x1c] sm:$0xf]
    %v590 = vld [vmem:[%s12 + $0x20] sm:$0xf]
    %v591 = vld [vmem:[%s12 + $0x24] sm:$0xf]
    %v592 = vld [vmem:[%s12 + $0x28] sm:$0xf]
    %v593 = vld [vmem:[%s12 + $0x2c] sm:$0xf]
    %v594 = vld [vmem:[%s12 + $0x30] sm:$0xf]
    %v595 = vld [vmem:[%s12 + $0x34] sm:$0xf]
    %v596 = vld [vmem:[%s12 + $0x38] sm:$0xf]
    %v597 = vld [vmem:[%s12 + $0x3c] sm:$0xf]
    %v598 = vld [vmem:[%s13] sm:$0x1]
    %v600 = vlaneseq
    %v601 = vshrl.u32 %v600, 7
    %v602 = vsub.s32 0, %v601
    %v603 = vrot.slane %v598, %v602
    %v621 = vunpack.c.l.b16 %v582
    %v622 = vunpack.c.l.b16 %v583
    %v623 = vunpack.c.l.b16 %v584
    %v624 = vunpack.c.l.b16 %v585
    %v625 = vunpack.c.l.b16 %v586
    %v626 = vunpack.c.l.b16 %v587
    %v627 = vunpack.c.l.b16 %v588
    %v628 = vunpack.c.l.b16 %v589
    %v629 = vunpack.c.l.b16 %v590
    %v630 = vunpack.c.l.b16 %v591
    %v631 = vunpack.c.l.b16 %v592
    %v632 = vunpack.c.l.b16 %v593
    %v633 = vunpack.c.l.b16 %v594
    %v634 = vunpack.c.l.b16 %v595
    %v635 = vunpack.c.l.b16 %v596
    %v636 = vunpack.c.l.b16 %v597
    %v637 = vpack.c.b16 %v622, %v621
    %v638 = vpack.c.b16 %v624, %v623
    %v639 = vpack.c.b16 %v626, %v625
    %v640 = vpack.c.b16 %v628, %v627
    %v641 = vpack.c.b16 %v630, %v629
    %v642 = vpack.c.b16 %v632, %v631
    %v643 = vpack.c.b16 %v634, %v633
    %v644 = vpack.c.b16 %v636, %v635
    %653 = vmatprep.subr.bf16.mxu0 0
    %654 = vmatpush1.bf16.msra.mxu0 %v644
    %655 = vmatprep.subr.bf16.mxu0 0
    %656 = vmatpush1.bf16.msra.mxu0 %v643
    %657 = vmatprep.subr.bf16.mxu0 0
    %658 = vmatpush1.bf16.msra.mxu0 %v642
    %659 = vmatprep.subr.bf16.mxu0 0
    %660 = vmatpush1.bf16.msra.mxu0 %v641
    %661 = vmatprep.subr.bf16.mxu0 0
    %662 = vmatpush1.bf16.msra.mxu0 %v640
    %663 = vmatprep.subr.bf16.mxu0 0
    %664 = vmatpush1.bf16.msra.mxu0 %v639
    %665 = vmatprep.subr.bf16.mxu0 0
    %666 = vmatpush1.bf16.msra.mxu0 %v638
    %667 = vmatprep.subr.bf16.mxu0 0
    %668 = vmatpush1.bf16.msra.mxu0 %v637
    %669 = vmatprep.subr.bf16.mxu0 0
    %670 = vmatpush2.bf16.msra.mxu0 0
    %671 = vmatprep.subr.bf16.mxu0 0
    %672 = vmatpush2.bf16.msra.mxu0 0
    %673 = vmatprep.subr.bf16.mxu0 0
    %674 = vmatpush2.bf16.msra.mxu0 0
    %675 = vmatprep.subr.bf16.mxu0 0
    %676 = vmatpush2.bf16.msra.mxu0 0
    %677 = vmatprep.subr.bf16.mxu0 0
    %678 = vmatpush2.bf16.msra.mxu0 0
    %679 = vmatprep.subr.bf16.mxu0 0
    %680 = vmatpush2.bf16.msra.mxu0 0
    %681 = vmatprep.subr.bf16.mxu0 0
    %682 = vmatpush2.bf16.msra.mxu0 0
    %683 = vmatprep.subr.bf16.mxu0 0
    %684 = vmatpush2.bf16.msra.mxu0 0
    %685 = vmatprep.mubr.bf16.mxu0 0
    %686 = vmatmul.mubr.bf16.gmra.mxu0 %v580
    %v687 = vpop.f32.mrf.mxu0
    %v688 = vadd.f32 %v603, %v687
    %v689 = vpop.f32.mrf.mxu0
    %v690 = vpop.f32.mrf.mxu0
    %v691 = vadd.f32 %v603, %v690
    %v692 = vpop.f32.mrf.mxu0
    %693 = vmatprep.mubr.bf16.mxu0 0
    %694 = vmatmul.mubr.bf16.gmra.mxu0 %v581
    %v695 = vpop.f32.mrf.mxu0
    %v696 = vadd.f32 %v603, %v695
    %v697 = vpop.f32.mrf.mxu0
    %v698 = vpop.f32.mrf.mxu0
    %v699 = vadd.f32 %v603, %v698
    %v700 = vpop.f32.mrf.mxu0
    %701 = vdwg.mxu0
    %v702 = vrot.slane %v576, 7
    %v703 = vrot.slane %v577, 7
    %v704 = vrot.slane %v578, 7
    %v705 = vrot.slane %v579, 7
    %v706 = vsel %vm193, %v704, %v705
    %v707 = vsel %vm193, %v703, %v704
    %v708 = vsel %vm193, %v702, %v703
    %v709 = vsel %vm193, %v705, %v702
    %v710 = vsel %vm230, %v709, 0.0
    %v711 = vsel %vm231, %v708, 0.0
    %v712 = vsel %vm232, %v707, 0.0
    %v713 = vsel %vm233, %v706, 0.0
    %v714 = vpack.c.bf16 %v711, %v710
    %v715 = vpack.c.bf16 %v713, %v712
    %v716 = vrot.slane %v576, 1
    %v717 = vrot.slane %v577, 1
    %v718 = vrot.slane %v578, 1
    %v719 = vrot.slane %v579, 1
    %vm720 = vcmp.lt.s32.totalorder %v192, 7
    %v721 = vsel %vm720, %v718, %v719
    %v722 = vsel %vm720, %v717, %v718
    %v723 = vsel %vm720, %v716, %v717
    %v724 = vsel %vm720, %v719, %v716
    %v725 = vadd.s32 %v113, 1
    %v726 = vadd.s32 %v114, 1
    %v727 = vadd.s32 %v115, 1
    %v728 = vadd.s32 %v116, 1
    %vm729 = vcmp.ge.s32.totalorder %v725, 0
    %vm730 = vcmp.ge.s32.totalorder %v726, 0
    %vm731 = vcmp.ge.s32.totalorder %v727, 0
    %vm732 = vcmp.ge.s32.totalorder %v728, 0
    %vm733 = vcmp.lt.s32.totalorder %v725, 16
    %vm734 = vcmp.lt.s32.totalorder %v726, 16
    %vm735 = vcmp.lt.s32.totalorder %v727, 16
    %vm736 = vcmp.lt.s32.totalorder %v728, 16
    %vm737 = vmand %vm729, %vm733
    %vm738 = vmand %vm730, %vm734
    %vm739 = vmand %vm731, %vm735
    %vm740 = vmand %vm732, %vm736
    %v741 = vsel %vm737, 1, 0
    %v742 = vsel %vm738, 1, 0
    %v743 = vsel %vm739, 1, 0
    %v744 = vsel %vm740, 1, 0
    %745 = vset.pattern.permute.xlu0 0
    %746 = vperm.xlu0 %745, %v741
    %v747 = vpop.permute.xlu0 %746
    %748 = vset.pattern.permute.xlu0 0
    %749 = vperm.xlu0 %748, %v742
    %v750 = vpop.permute.xlu0 %749
    %751 = vset.pattern.permute.xlu0 0
    %752 = vperm.xlu0 %751, %v743
    %v753 = vpop.permute.xlu0 %752
    %754 = vset.pattern.permute.xlu0 0
    %755 = vperm.xlu0 %754, %v744
    %v756 = vpop.permute.xlu0 %755
    %vm757 = vcmp.eq.s32.totalorder %v747, 1
    %vm758 = vcmp.eq.s32.totalorder %v750, 1
    %vm759 = vcmp.eq.s32.totalorder %v753, 1
    %vm760 = vcmp.eq.s32.totalorder %v756, 1
    %v761 = vsel %vm757, %v723, 0.0
    %v762 = vsel %vm758, %v722, 0.0
    %v763 = vsel %vm759, %v721, 0.0
    %v764 = vsel %vm760, %v724, 0.0
    %v765 = vpack.c.bf16 %v762, %v761
    %v766 = vpack.c.bf16 %v764, %v763
    %v767 = vld [vmem:[#allocation4] sm:$0xf]
    %v768 = vld [vmem:[#allocation4 + $0x4] sm:$0xf]
    %v769 = vld [vmem:[#allocation4 + $0x8] sm:$0xf]
    %v770 = vld [vmem:[#allocation4 + $0xc] sm:$0xf]
    %v771 = vld [vmem:[#allocation4 + $0x10] sm:$0xf]
    %v772 = vld [vmem:[#allocation4 + $0x14] sm:$0xf]
    %v773 = vld [vmem:[#allocation4 + $0x18] sm:$0xf]
    %v774 = vld [vmem:[#allocation4 + $0x1c] sm:$0xf]
    %v775 = vld [vmem:[#allocation4 + $0x20] sm:$0xf]
    %v776 = vld [vmem:[#allocation4 + $0x24] sm:$0xf]
    %v777 = vld [vmem:[#allocation4 + $0x28] sm:$0xf]
    %v778 = vld [vmem:[#allocation4 + $0x2c] sm:$0xf]
    %v779 = vld [vmem:[#allocation4 + $0x30] sm:$0xf]
    %v780 = vld [vmem:[#allocation4 + $0x34] sm:$0xf]
    %v781 = vld [vmem:[#allocation4 + $0x38] sm:$0xf]
    %v782 = vld [vmem:[#allocation4 + $0x3c] sm:$0xf]
    %v783 = vld [vmem:[#allocation4 + $0x40] sm:$0xf]
    %v784 = vld [vmem:[#allocation4 + $0x44] sm:$0xf]
    %v785 = vld [vmem:[#allocation4 + $0x48] sm:$0xf]
    %v786 = vld [vmem:[#allocation4 + $0x4c] sm:$0xf]
    %v787 = vld [vmem:[#allocation4 + $0x50] sm:$0xf]
    %v788 = vld [vmem:[#allocation4 + $0x54] sm:$0xf]
    %v789 = vld [vmem:[#allocation4 + $0x58] sm:$0xf]
    %v790 = vld [vmem:[#allocation4 + $0x5c] sm:$0xf]
    %v791 = vld [vmem:[#allocation4 + $0x60] sm:$0xf]
    %v792 = vld [vmem:[#allocation4 + $0x64] sm:$0xf]
    %v793 = vld [vmem:[#allocation4 + $0x68] sm:$0xf]
    %v794 = vld [vmem:[#allocation4 + $0x6c] sm:$0xf]
    %v795 = vld [vmem:[#allocation4 + $0x70] sm:$0xf]
    %v796 = vld [vmem:[#allocation4 + $0x74] sm:$0xf]
    %v797 = vld [vmem:[#allocation4 + $0x78] sm:$0xf]
    %v798 = vld [vmem:[#allocation4 + $0x7c] sm:$0xf]
    %v799 = vld [vmem:[%s9] sm:$0x1]
    %v801 = vlaneseq
    %v802 = vshrl.u32 %v801, 7
    %v803 = vsub.s32 0, %v802
    %v804 = vrot.slane %v799, %v803
    %v838 = vunpack.c.l.b16 %v767
    %v839 = vunpack.c.l.b16 %v768
    %v840 = vunpack.c.l.b16 %v769
    %v841 = vunpack.c.l.b16 %v770
    %v842 = vunpack.c.l.b16 %v771
    %v843 = vunpack.c.l.b16 %v772
    %v844 = vunpack.c.l.b16 %v773
    %v845 = vunpack.c.l.b16 %v774
    %v846 = vunpack.c.l.b16 %v775
    %v847 = vunpack.c.l.b16 %v776
    %v848 = vunpack.c.l.b16 %v777
    %v849 = vunpack.c.l.b16 %v778
    %v850 = vunpack.c.l.b16 %v779
    %v851 = vunpack.c.l.b16 %v780
    %v852 = vunpack.c.l.b16 %v781
    %v853 = vunpack.c.l.b16 %v782
    %v854 = vunpack.c.l.b16 %v783
    %v855 = vunpack.c.l.b16 %v784
    %v856 = vunpack.c.l.b16 %v785
    %v857 = vunpack.c.l.b16 %v786
    %v858 = vunpack.c.l.b16 %v787
    %v859 = vunpack.c.l.b16 %v788
    %v860 = vunpack.c.l.b16 %v789
    %v861 = vunpack.c.l.b16 %v790
    %v862 = vunpack.c.l.b16 %v791
    %v863 = vunpack.c.l.b16 %v792
    %v864 = vunpack.c.l.b16 %v793
    %v865 = vunpack.c.l.b16 %v794
    %v866 = vunpack.c.l.b16 %v795
    %v867 = vunpack.c.l.b16 %v796
    %v868 = vunpack.c.l.b16 %v797
    %v869 = vunpack.c.l.b16 %v798
    %v870 = vpack.c.b16 %v839, %v838
    %v871 = vpack.c.b16 %v841, %v840
    %v872 = vpack.c.b16 %v843, %v842
    %v873 = vpack.c.b16 %v845, %v844
    %v874 = vpack.c.b16 %v847, %v846
    %v875 = vpack.c.b16 %v849, %v848
    %v876 = vpack.c.b16 %v851, %v850
    %v877 = vpack.c.b16 %v853, %v852
    %v878 = vpack.c.b16 %v855, %v854
    %v879 = vpack.c.b16 %v857, %v856
    %v880 = vpack.c.b16 %v859, %v858
    %v881 = vpack.c.b16 %v861, %v860
    %v882 = vpack.c.b16 %v863, %v862
    %v883 = vpack.c.b16 %v865, %v864
    %v884 = vpack.c.b16 %v867, %v866
    %v885 = vpack.c.b16 %v869, %v868
    %902 = vmatprep.subr.bf16.mxu0 0
    %903 = vmatpush1.bf16.msra.mxu0 %v877
    %904 = vmatprep.subr.bf16.mxu0 0
    %905 = vmatpush1.bf16.msra.mxu0 %v876
    %906 = vmatprep.subr.bf16.mxu0 0
    %907 = vmatpush1.bf16.msra.mxu0 %v875
    %908 = vmatprep.subr.bf16.mxu0 0
    %909 = vmatpush1.bf16.msra.mxu0 %v874
    %910 = vmatprep.subr.bf16.mxu0 0
    %911 = vmatpush1.bf16.msra.mxu0 %v873
    %912 = vmatprep.subr.bf16.mxu0 0
    %913 = vmatpush1.bf16.msra.mxu0 %v872
    %914 = vmatprep.subr.bf16.mxu0 0
    %915 = vmatpush1.bf16.msra.mxu0 %v871
    %916 = vmatprep.subr.bf16.mxu0 0
    %917 = vmatpush1.bf16.msra.mxu0 %v870
    %918 = vmatprep.subr.bf16.mxu0 0
    %919 = vmatpush2.bf16.msra.mxu0 %v885
    %920 = vmatprep.subr.bf16.mxu0 0
    %921 = vmatpush2.bf16.msra.mxu0 %v884
    %922 = vmatprep.subr.bf16.mxu0 0
    %923 = vmatpush2.bf16.msra.mxu0 %v883
    %924 = vmatprep.subr.bf16.mxu0 0
    %925 = vmatpush2.bf16.msra.mxu0 %v882
    %926 = vmatprep.subr.bf16.mxu0 0
    %927 = vmatpush2.bf16.msra.mxu0 %v881
    %928 = vmatprep.subr.bf16.mxu0 0
    %929 = vmatpush2.bf16.msra.mxu0 %v880
    %930 = vmatprep.subr.bf16.mxu0 0
    %931 = vmatpush2.bf16.msra.mxu0 %v879
    %932 = vmatprep.subr.bf16.mxu0 0
    %933 = vmatpush2.bf16.msra.mxu0 %v878
    %934 = vmatprep.mubr.bf16.mxu0 %v765
    %935 = vmatmul.mubr.bf16.gmra.mxu0 %v714
    %v936 = vpop.f32.mrf.mxu0
    %v937 = vadd.f32 %v804, %v936
    %v938 = vpop.f32.mrf.mxu0
    %v939 = vpop.f32.mrf.mxu0
    %v940 = vadd.f32 %v804, %v939
    %v941 = vpop.f32.mrf.mxu0
    %942 = vmatprep.mubr.bf16.mxu0 %v766
    %943 = vmatmul.mubr.bf16.gmra.mxu0 %v715
    %v944 = vpop.f32.mrf.mxu0
    %v945 = vadd.f32 %v804, %v944
    %v946 = vpop.f32.mrf.mxu0
    %v947 = vpop.f32.mrf.mxu0
    %v948 = vadd.f32 %v804, %v947
    %v949 = vpop.f32.mrf.mxu0
    %950 = vdwg.mxu0
    %v951 = vmax.f32 %v937, 0.0
    %v952 = vmax.f32 %v940, 0.0
    %v953 = vmax.f32 %v945, 0.0
    %v954 = vmax.f32 %v948, 0.0
    %v955 = vrot.slane %v951, 7
    %v956 = vrot.slane %v952, 7
    %v957 = vrot.slane %v953, 7
    %v958 = vrot.slane %v954, 7
    %v959 = vsel %vm193, %v957, %v958
    %v960 = vsel %vm193, %v956, %v957
    %v961 = vsel %vm193, %v955, %v956
    %v962 = vsel %vm193, %v958, %v955
    %v963 = vsel %vm230, %v962, 0.0
    %v964 = vsel %vm231, %v961, 0.0
    %v965 = vsel %vm232, %v960, 0.0
    %v966 = vsel %vm233, %v959, 0.0
    %v967 = vpack.c.bf16 %v964, %v963
    %v968 = vpack.c.bf16 %v966, %v965
    %v969 = vrot.slane %v951, 1
    %v970 = vrot.slane %v952, 1
    %v971 = vrot.slane %v953, 1
    %v972 = vrot.slane %v954, 1
    %v973 = vsel %vm720, %v971, %v972
    %v974 = vsel %vm720, %v970, %v971
    %v975 = vsel %vm720, %v969, %v970
    %v976 = vsel %vm720, %v972, %v969
    %v977 = vsel %vm757, %v975, 0.0
    %v978 = vsel %vm758, %v974, 0.0
    %v979 = vsel %vm759, %v973, 0.0
    %v980 = vsel %vm760, %v976, 0.0
    %v981 = vpack.c.bf16 %v978, %v977
    %v982 = vpack.c.bf16 %v980, %v979
    %v983 = vld [vmem:[#allocation6] sm:$0xf]
    %v984 = vld [vmem:[#allocation6 + $0x4] sm:$0xf]
    %v985 = vld [vmem:[#allocation6 + $0x8] sm:$0xf]
    %v986 = vld [vmem:[#allocation6 + $0xc] sm:$0xf]
    %v987 = vld [vmem:[#allocation6 + $0x10] sm:$0xf]
    %v988 = vld [vmem:[#allocation6 + $0x14] sm:$0xf]
    %v989 = vld [vmem:[#allocation6 + $0x18] sm:$0xf]
    %v990 = vld [vmem:[#allocation6 + $0x1c] sm:$0xf]
    %v991 = vld [vmem:[#allocation6 + $0x20] sm:$0xf]
    %v992 = vld [vmem:[#allocation6 + $0x24] sm:$0xf]
    %v993 = vld [vmem:[#allocation6 + $0x28] sm:$0xf]
    %v994 = vld [vmem:[#allocation6 + $0x2c] sm:$0xf]
    %v995 = vld [vmem:[#allocation6 + $0x30] sm:$0xf]
    %v996 = vld [vmem:[#allocation6 + $0x34] sm:$0xf]
    %v997 = vld [vmem:[#allocation6 + $0x38] sm:$0xf]
    %v998 = vld [vmem:[#allocation6 + $0x3c] sm:$0xf]
    %v999 = vld [vmem:[#allocation6 + $0x40] sm:$0xf]
    %v1000 = vld [vmem:[#allocation6 + $0x44] sm:$0xf]
    %v1001 = vld [vmem:[#allocation6 + $0x48] sm:$0xf]
    %v1002 = vld [vmem:[#allocation6 + $0x4c] sm:$0xf]
    %v1003 = vld [vmem:[#allocation6 + $0x50] sm:$0xf]
    %v1004 = vld [vmem:[#allocation6 + $0x54] sm:$0xf]
    %v1005 = vld [vmem:[#allocation6 + $0x58] sm:$0xf]
    %v1006 = vld [vmem:[#allocation6 + $0x5c] sm:$0xf]
    %v1007 = vld [vmem:[#allocation6 + $0x60] sm:$0xf]
    %v1008 = vld [vmem:[#allocation6 + $0x64] sm:$0xf]
    %v1009 = vld [vmem:[#allocation6 + $0x68] sm:$0xf]
    %v1010 = vld [vmem:[#allocation6 + $0x6c] sm:$0xf]
    %v1011 = vld [vmem:[#allocation6 + $0x70] sm:$0xf]
    %v1012 = vld [vmem:[#allocation6 + $0x74] sm:$0xf]
    %v1013 = vld [vmem:[#allocation6 + $0x78] sm:$0xf]
    %v1014 = vld [vmem:[#allocation6 + $0x7c] sm:$0xf]
    %v1015 = vld [vmem:[%s11] sm:$0x1]
    %v1017 = vlaneseq
    %v1018 = vshrl.u32 %v1017, 7
    %v1019 = vsub.s32 0, %v1018
    %v1020 = vrot.slane %v1015, %v1019
    %v1054 = vunpack.c.l.b16 %v983
    %v1055 = vunpack.c.l.b16 %v984
    %v1056 = vunpack.c.l.b16 %v985
    %v1057 = vunpack.c.l.b16 %v986
    %v1058 = vunpack.c.l.b16 %v987
    %v1059 = vunpack.c.l.b16 %v988
    %v1060 = vunpack.c.l.b16 %v989
    %v1061 = vunpack.c.l.b16 %v990
    %v1062 = vunpack.c.l.b16 %v991
    %v1063 = vunpack.c.l.b16 %v992
    %v1064 = vunpack.c.l.b16 %v993
    %v1065 = vunpack.c.l.b16 %v994
    %v1066 = vunpack.c.l.b16 %v995
    %v1067 = vunpack.c.l.b16 %v996
    %v1068 = vunpack.c.l.b16 %v997
    %v1069 = vunpack.c.l.b16 %v998
    %v1070 = vunpack.c.l.b16 %v999
    %v1071 = vunpack.c.l.b16 %v1000
    %v1072 = vunpack.c.l.b16 %v1001
    %v1073 = vunpack.c.l.b16 %v1002
    %v1074 = vunpack.c.l.b16 %v1003
    %v1075 = vunpack.c.l.b16 %v1004
    %v1076 = vunpack.c.l.b16 %v1005
    %v1077 = vunpack.c.l.b16 %v1006
    %v1078 = vunpack.c.l.b16 %v1007
    %v1079 = vunpack.c.l.b16 %v1008
    %v1080 = vunpack.c.l.b16 %v1009
    %v1081 = vunpack.c.l.b16 %v1010
    %v1082 = vunpack.c.l.b16 %v1011
    %v1083 = vunpack.c.l.b16 %v1012
    %v1084 = vunpack.c.l.b16 %v1013
    %v1085 = vunpack.c.l.b16 %v1014
    %v1086 = vpack.c.b16 %v1055, %v1054
    %v1087 = vpack.c.b16 %v1057, %v1056
    %v1088 = vpack.c.b16 %v1059, %v1058
    %v1089 = vpack.c.b16 %v1061, %v1060
    %v1090 = vpack.c.b16 %v1063, %v1062
    %v1091 = vpack.c.b16 %v1065, %v1064
    %v1092 = vpack.c.b16 %v1067, %v1066
    %v1093 = vpack.c.b16 %v1069, %v1068
    %v1094 = vpack.c.b16 %v1071, %v1070
    %v1095 = vpack.c.b16 %v1073, %v1072
    %v1096 = vpack.c.b16 %v1075, %v1074
    %v1097 = vpack.c.b16 %v1077, %v1076
    %v1098 = vpack.c.b16 %v1079, %v1078
    %v1099 = vpack.c.b16 %v1081, %v1080
    %v1100 = vpack.c.b16 %v1083, %v1082
    %v1101 = vpack.c.b16 %v1085, %v1084
    %1118 = vmatprep.subr.bf16.mxu0 0
    %1119 = vmatpush1.bf16.msra.mxu0 %v1093
    %1120 = vmatprep.subr.bf16.mxu0 0
    %1121 = vmatpush1.bf16.msra.mxu0 %v1092
    %1122 = vmatprep.subr.bf16.mxu0 0
    %1123 = vmatpush1.bf16.msra.mxu0 %v1091
    %1124 = vmatprep.subr.bf16.mxu0 0
    %1125 = vmatpush1.bf16.msra.mxu0 %v1090
    %1126 = vmatprep.subr.bf16.mxu0 0
    %1127 = vmatpush1.bf16.msra.mxu0 %v1089
    %1128 = vmatprep.subr.bf16.mxu0 0
    %1129 = vmatpush1.bf16.msra.mxu0 %v1088
    %1130 = vmatprep.subr.bf16.mxu0 0
    %1131 = vmatpush1.bf16.msra.mxu0 %v1087
    %1132 = vmatprep.subr.bf16.mxu0 0
    %1133 = vmatpush1.bf16.msra.mxu0 %v1086
    %1134 = vmatprep.subr.bf16.mxu0 0
    %1135 = vmatpush2.bf16.msra.mxu0 %v1101
    %1136 = vmatprep.subr.bf16.mxu0 0
    %1137 = vmatpush2.bf16.msra.mxu0 %v1100
    %1138 = vmatprep.subr.bf16.mxu0 0
    %1139 = vmatpush2.bf16.msra.mxu0 %v1099
    %1140 = vmatprep.subr.bf16.mxu0 0
    %1141 = vmatpush2.bf16.msra.mxu0 %v1098
    %1142 = vmatprep.subr.bf16.mxu0 0
    %1143 = vmatpush2.bf16.msra.mxu0 %v1097
    %1144 = vmatprep.subr.bf16.mxu0 0
    %1145 = vmatpush2.bf16.msra.mxu0 %v1096
    %1146 = vmatprep.subr.bf16.mxu0 0
    %1147 = vmatpush2.bf16.msra.mxu0 %v1095
    %1148 = vmatprep.subr.bf16.mxu0 0
    %1149 = vmatpush2.bf16.msra.mxu0 %v1094
    %1150 = vmatprep.mubr.bf16.mxu0 %v981
    %1151 = vmatmul.mubr.bf16.gmra.mxu0 %v967
    %v1152 = vpop.f32.mrf.mxu0
    %v1153 = vadd.f32 %v1020, %v1152
    %v1154 = vpop.f32.mrf.mxu0
    %v1155 = vpop.f32.mrf.mxu0
    %v1156 = vadd.f32 %v1020, %v1155
    %v1157 = vpop.f32.mrf.mxu0
    %1158 = vmatprep.mubr.bf16.mxu0 %v982
    %1159 = vmatmul.mubr.bf16.gmra.mxu0 %v968
    %v1160 = vpop.f32.mrf.mxu0
    %v1161 = vadd.f32 %v1020, %v1160
    %v1162 = vpop.f32.mrf.mxu0
    %v1163 = vpop.f32.mrf.mxu0
    %v1164 = vadd.f32 %v1020, %v1163
    %v1165 = vpop.f32.mrf.mxu0
    %1166 = vdwg.mxu0
    %v1167 = vmax.f32 %v1153, 0.0
    %v1168 = vmax.f32 %v1156, 0.0
    %v1169 = vmax.f32 %v1161, 0.0
    %v1170 = vmax.f32 %v1164, 0.0
    %v1171 = vadd.f32 %v1167, %v688
    %v1172 = vadd.f32 %v1168, %v691
    %v1173 = vadd.f32 %v1169, %v696
    %v1174 = vadd.f32 %v1170, %v699
    %v1175 = vmax.f32 %v1171, 0.0
    %v1176 = vmax.f32 %v1172, 0.0
    %v1177 = vmax.f32 %v1173, 0.0
    %v1178 = vmax.f32 %v1174, 0.0
    %v1179 = vpack.c.bf16 %v1176, %v1175
    %v1180 = vpack.c.bf16 %v1178, %v1177
    %v1181 = vld [vmem:[#allocation7] sm:$0xf]
    %v1182 = vld [vmem:[#allocation7 + $0x4] sm:$0xf]
    %v1183 = vld [vmem:[#allocation7 + $0x8] sm:$0xf]
    %v1184 = vld [vmem:[#allocation7 + $0xc] sm:$0xf]
    %v1185 = vld [vmem:[#allocation7 + $0x10] sm:$0xf]
    %v1186 = vld [vmem:[#allocation7 + $0x14] sm:$0xf]
    %v1187 = vld [vmem:[#allocation7 + $0x18] sm:$0xf]
    %v1188 = vld [vmem:[#allocation7 + $0x1c] sm:$0xf]
    %v1189 = vld [vmem:[#allocation7 + $0x20] sm:$0xf]
    %v1190 = vld [vmem:[#allocation7 + $0x24] sm:$0xf]
    %v1191 = vld [vmem:[#allocation7 + $0x28] sm:$0xf]
    %v1192 = vld [vmem:[#allocation7 + $0x2c] sm:$0xf]
    %v1193 = vld [vmem:[#allocation7 + $0x30] sm:$0xf]
    %v1194 = vld [vmem:[#allocation7 + $0x34] sm:$0xf]
    %v1195 = vld [vmem:[#allocation7 + $0x38] sm:$0xf]
    %v1196 = vld [vmem:[#allocation7 + $0x3c] sm:$0xf]
    %v1197 = vld [vmem:[%s15] sm:$0x1]
    %v1199 = vlaneseq
    %v1200 = vshrl.u32 %v1199, 7
    %v1201 = vsub.s32 0, %v1200
    %v1202 = vrot.slane %v1197, %v1201
    %v1220 = vunpack.c.l.b16 %v1181
    %v1221 = vunpack.c.l.b16 %v1182
    %v1222 = vunpack.c.l.b16 %v1183
    %v1223 = vunpack.c.l.b16 %v1184
    %v1224 = vunpack.c.l.b16 %v1185
    %v1225 = vunpack.c.l.b16 %v1186
    %v1226 = vunpack.c.l.b16 %v1187
    %v1227 = vunpack.c.l.b16 %v1188
    %v1228 = vunpack.c.l.b16 %v1189
    %v1229 = vunpack.c.l.b16 %v1190
    %v1230 = vunpack.c.l.b16 %v1191
    %v1231 = vunpack.c.l.b16 %v1192
    %v1232 = vunpack.c.l.b16 %v1193
    %v1233 = vunpack.c.l.b16 %v1194
    %v1234 = vunpack.c.l.b16 %v1195
    %v1235 = vunpack.c.l.b16 %v1196
    %v1236 = vpack.c.b16 %v1221, %v1220
    %v1237 = vpack.c.b16 %v1223, %v1222
    %v1238 = vpack.c.b16 %v1225, %v1224
    %v1239 = vpack.c.b16 %v1227, %v1226
    %v1240 = vpack.c.b16 %v1229, %v1228
    %v1241 = vpack.c.b16 %v1231, %v1230
    %v1242 = vpack.c.b16 %v1233, %v1232
    %v1243 = vpack.c.b16 %v1235, %v1234
    %1252 = vmatprep.subr.bf16.mxu0 0
    %1253 = vmatpush1.bf16.msra.mxu0 %v1243
    %1254 = vmatprep.subr.bf16.mxu0 0
    %1255 = vmatpush1.bf16.msra.mxu0 %v1242
    %1256 = vmatprep.subr.bf16.mxu0 0
    %1257 = vmatpush1.bf16.msra.mxu0 %v1241
    %1258 = vmatprep.subr.bf16.mxu0 0
    %1259 = vmatpush1.bf16.msra.mxu0 %v1240
    %1260 = vmatprep.subr.bf16.mxu0 0
    %1261 = vmatpush1.bf16.msra.mxu0 %v1239
    %1262 = vmatprep.subr.bf16.mxu0 0
    %1263 = vmatpush1.bf16.msra.mxu0 %v1238
    %1264 = vmatprep.subr.bf16.mxu0 0
    %1265 = vmatpush1.bf16.msra.mxu0 %v1237
    %1266 = vmatprep.subr.bf16.mxu0 0
    %1267 = vmatpush1.bf16.msra.mxu0 %v1236
    %1268 = vmatprep.subr.bf16.mxu0 0
    %1269 = vmatpush2.bf16.msra.mxu0 0
    %1270 = vmatprep.subr.bf16.mxu0 0
    %1271 = vmatpush2.bf16.msra.mxu0 0
    %1272 = vmatprep.subr.bf16.mxu0 0
    %1273 = vmatpush2.bf16.msra.mxu0 0
    %1274 = vmatprep.subr.bf16.mxu0 0
    %1275 = vmatpush2.bf16.msra.mxu0 0
    %1276 = vmatprep.subr.bf16.mxu0 0
    %1277 = vmatpush2.bf16.msra.mxu0 0
    %1278 = vmatprep.subr.bf16.mxu0 0
    %1279 = vmatpush2.bf16.msra.mxu0 0
    %1280 = vmatprep.subr.bf16.mxu0 0
    %1281 = vmatpush2.bf16.msra.mxu0 0
    %1282 = vmatprep.subr.bf16.mxu0 0
    %1283 = vmatpush2.bf16.msra.mxu0 0
    %1284 = vmatprep.mubr.bf16.mxu0 0
    %1285 = vmatmul.mubr.bf16.gmra.mxu0 %v1179
    %v1286 = vpop.f32.mrf.mxu0
    %v1287 = vadd.f32 %v1202, %v1286
    %v1288 = vpop.f32.mrf.mxu0
    %v1289 = vpop.f32.mrf.mxu0
    %v1290 = vadd.f32 %v1202, %v1289
    %v1291 = vpop.f32.mrf.mxu0
    %1292 = vmatprep.mubr.bf16.mxu0 0
    %1293 = vmatmul.mubr.bf16.gmra.mxu0 %v1180
    %v1294 = vpop.f32.mrf.mxu0
    %v1295 = vadd.f32 %v1202, %v1294
    %v1296 = vpop.f32.mrf.mxu0
    %v1297 = vpop.f32.mrf.mxu0
    %v1298 = vadd.f32 %v1202, %v1297
    %v1299 = vpop.f32.mrf.mxu0
    %1300 = vdwg.mxu0
    %vm1301 = vcmask 23552
    %1302 = vst.msk [vmem:[%s16] sm:$0xff] %vm1301, %v1287
    %1303 = vst.msk [vmem:[%s16 + $0x8] sm:$0xff] %vm1301, %v1290
    %1304 = vst.msk [vmem:[%s16 + $0x10] sm:$0xff] %vm1301, %v1295
    %1305 = vst.msk [vmem:[%s16 + $0x18] sm:$0xff] %vm1301, %v1298
    // Predicated region
    $region82: #{tpu_custom_call.1} parent=1 // pred_check
      _
    $region83: #{tpu_custom_call.1} parent=1 // pred_check_branch
      %1307 = sbr.rel (0) target = $region85
    $region84: #{tpu_custom_call.1} parent=1 // pred_region
      _
    $region85: #{tpu_custom_call.1} parent=1 // pred_fallthru
      _
    // Predicated region
    $region86: #{tpu_custom_call.1} parent=1 // pred_check
      _
    $region87: #{tpu_custom_call.1} parent=1 // pred_check_branch
      %1309 = sbr.rel (0) target = $region89
    $region88: #{tpu_custom_call.1} parent=1 // pred_region
      _
    $region89: #{tpu_custom_call.1} parent=1 // pred_fallthru
      _
    %1310 = vsyncpa [#allocation3], 1
    %1311 = vsyncpa [#allocation5], 1
    %1312 = vsyncpa [#allocation8], 1

</llo_original>
